<compile_context>
chip_gen: v7x
topology: tpu7x:2x2x1
jax: 0.10.0
libtpu: 0.0.40
codegen_flags: <defaults>
</compile_context>

<pallas_src>
import functools

import jax
import jax.numpy as jnp
from jax import lax
from jax.experimental import pallas as pl
from jax.experimental.pallas import tpu as pltpu

LN_EPS = 1e-5            # cfg.layer_norm_eps
MASK_EPS = 1e-10         # PyTorch reference writes `eps` (NOT -inf) into masked scores
INIT_RANGE = 0.02        # cfg.init_range
MATMUL_DTYPE = jnp.bfloat16  # MXU-native operand dtype; accumulation stays f32


def _tpu_vmem_capacity_bytes():
    try:
        return int(pltpu.get_tpu_info().vmem_capacity_bytes)
    except Exception:
        return 64 * 1024 * 1024   # conservative fallback: assume v7x-class per-core VMEM


_VMEM_CAP = _tpu_vmem_capacity_bytes()
# v7x: 64 MiB VMEM per TensorCore, 2 TCs per chip. v5e/v6e: 128 MiB, 1 TC.
_TWO_CORES = _VMEM_CAP <= 96 * 1024 * 1024
VMEM_LIMIT_BYTES = (40 if _TWO_CORES else 96) * 1024 * 1024
MAX_VOCAB_TILE = 2048 if _TWO_CORES else 8192
_ACT_VMEM_BUDGET = VMEM_LIMIT_BYTES // 3   # rough share of scoped VMEM for activations


# ------------------------- in-kernel math helpers -------------------------

def _layernorm(x, w, b, eps):
    # torch.var_mean(..., unbiased=False): population variance; rsqrt -> EUP slot
    mean = jnp.mean(x, axis=-1, keepdims=True)
    var = jnp.mean(jnp.square(x - mean), axis=-1, keepdims=True)
    return (x - mean) * lax.rsqrt(var + eps) * w + b


_SQRT_2_OVER_PI = 0.7978845608028654


def _gelu_tanh(x):
    # TODO(synk): PyTorch nn.GELU() default is exact-erf; tanh approximation kept per
    # perf review (routes transcendental to EUP), max deviation ~1e-3 absolute.
    return 0.5 * x * (1.0 + jnp.tanh(_SQRT_2_OVER_PI * (x + 0.044715 * x * x * x)))


# ------------------------------ Pallas kernels ------------------------------

def block_kernel(x_ref, ln1w_ref, ln1b_ref, wqkv_ref, bqkv_ref, wo_ref, bo_ref,
                 ln2w_ref, ln2b_ref, wi_ref, bi_ref, wout_ref, bout_ref,
                 lnfw_ref, lnfb_ref, o_ref, *, ln_eps, mask_eps, n_heads, d_head,
                 bt, seq):
    """All TransformerBlocks (+ fused ln_final) for one (batch-chunk, layer) point.

    grid = (batch_chunks, n_layers). The residual stream lives directly in the
    o_ref output block: its block index is constant along the sequential
    ('arbitrary') layer axis, so it stays VMEM-resident and is written back to
    HBM only once per batch chunk.
    """
    layer = pl.program_id(1)
    last_layer = pl.num_programs(1) - 1
    emb = x_ref.shape[-1]
    rows = bt * seq
    hd = n_heads * d_head

    @pl.when(layer == 0)
    def _init():
        o_ref[...] = x_ref[...]

    resid = o_ref[...].reshape(rows, emb)                            # (rows, E) f32

    # ---- LN1 + fused QKV projection (one wide bf16 MXU matmul) ----
    x_ln = _layernorm(resid, ln1w_ref[0], ln1b_ref[0], ln_eps)
    qkv = jnp.dot(x_ln.astype(wqkv_ref.dtype), wqkv_ref[0],
                  preferred_element_type=jnp.float32) + bqkv_ref[0]  # (rows, 3*H*Dh)

    # Causal mask: future (k > q) positions overwritten with `eps` — faithful to
    # the PyTorch reference, which literally assigns eps (1e-10), NOT -inf.
    q_idx = lax.broadcasted_iota(jnp.int32, (seq, seq), 0)
    k_idx = lax.broadcasted_iota(jnp.int32, (seq, seq), 1)
    causal_mask = (q_idx < k_idx)[None, :, :]                        # (1, S, S)
    scale = 1.0 / (d_head ** 0.5)

    # ---- attention: batch handled by a leading einsum dim, static loop over
    # heads only. bf16 MXU operands; per-head outputs accumulated directly into
    # a lane-dense (rows, E) slab via per-head W_o matmuls (no concatenates).
    # TODO(synk): for seq >~ 1024 switch to a KV-tiled online-softmax (flash)
    # loop so the (bt, S, S) scores never fully materialize in VMEM.
    attn = None
    for n in range(n_heads):                                         # static unroll
        qh = qkv[:, n * d_head:(n + 1) * d_head]
        kh = qkv[:, hd + n * d_head:hd + (n + 1) * d_head]
        vh = qkv[:, 2 * hd + n * d_head:2 * hd + (n + 1) * d_head]
        qh = qh.reshape(bt, seq, d_head).astype(MATMUL_DTYPE)
        kh = kh.reshape(bt, seq, d_head).astype(MATMUL_DTYPE)
        vh = vh.reshape(bt, seq, d_head).astype(MATMUL_DTYPE)
        scores = jnp.einsum('bqd,bkd->bqk', qh, kh,
                            preferred_element_type=jnp.float32) * scale
        scores = jnp.where(causal_mask, mask_eps, scores)
        smax = jnp.max(scores, axis=-1, keepdims=True)
        ex = jnp.exp(scores - smax)
        # exact division (not approx reciprocal) for parity with torch.softmax
        probs = ex / jnp.sum(ex, axis=-1, keepdims=True)
        wv = jnp.einsum('bqk,bkd->bqd', probs.astype(MATMUL_DTYPE), vh,
                        preferred_element_type=jnp.float32)          # (bt, S, Dh)
        contrib = jnp.dot(wv.reshape(rows, d_head).astype(wo_ref.dtype),
                          wo_ref[0, n], preferred_element_type=jnp.float32)
        attn = contrib if attn is None else attn + contrib
    attn_out = attn + bo_ref[0]
    mid = attn_out + resid

    # ---- LN2 + MLP ----
    # TODO(synk): tile W_in/W_out over d_mlp (extra grid axis or emit_pipeline)
    # for configs where the per-layer bf16 weight set approaches the VMEM limit.
    mid_ln = _layernorm(mid, ln2w_ref[0], ln2b_ref[0], ln_eps)
    h = jnp.dot(mid_ln.astype(wi_ref.dtype), wi_ref[0],
                preferred_element_type=jnp.float32) + bi_ref[0]
    act = _gelu_tanh(h)
    mlp_out = jnp.dot(act.astype(wout_ref.dtype), wout_ref[0],
                      preferred_element_type=jnp.float32) + bout_ref[0]
    new_resid = mlp_out + mid

    @pl.when(layer < last_layer)
    def _store_resid():
        o_ref[...] = new_resid.reshape(o_ref.shape)

    @pl.when(layer == last_layer)
    def _finalize():
        # ln_final fused into the last-layer writeback (not recomputed per vocab tile)
        normed = _layernorm(new_resid, lnfw_ref[...], lnfb_ref[...], ln_eps)
        o_ref[...] = normed.reshape(o_ref.shape)


def unembed_kernel(x_ref, lnw_ref, lnb_ref, wu_ref, bu_ref, o_ref, *, ln_eps, apply_ln):
    """Unembed for one (vocab-tile, batch-chunk) grid point."""
    bt, seq, emb = x_ref.shape
    x = x_ref[...].reshape(bt * seq, emb)
    if apply_ln:   # only used when there are zero transformer blocks
        x = _layernorm(x, lnw_ref[...], lnb_ref[...], ln_eps)
    logits = jnp.dot(x.astype(wu_ref.dtype), wu_ref[...],
                     preferred_element_type=jnp.float32) + bu_ref[...]
    o_ref[...] = logits.reshape(o_ref.shape)


# ------------------------------ wrappers ------------------------------

def _round_up(x, m):
    return ((x + m - 1) // m) * m


def _pick_bt(batch, seq, bytes_per_row):
    """Largest divisor of `batch` whose per-chunk activation footprint fits the
    VMEM budget. On 2-TensorCore chips (v7x) keep >=2 batch grid steps so both
    cores get work along the 'parallel' batch axis."""
    max_bt = batch
    if _TWO_CORES and batch >= 2:
        max_bt = batch // 2
    best = 1
    for bt in range(1, max_bt + 1):
        if batch % bt == 0 and bt * seq * bytes_per_row <= _ACT_VMEM_BUDGET:
            best = bt
    return best


def _pick_vocab_tile(v_pad):
    t = min(MAX_VOCAB_TILE, v_pad)
    t = max(128, (t // 128) * 128)
    while v_pad % t != 0:
        t -= 128
    return t


def _stack(blocks, key):
    return jnp.stack([blk[key] for blk in blocks], axis=0)


def _prep_block_params(blocks, compute_dtype):
    """Stack per-layer weights (leading n_layers dim), fuse QKV, keep W_o per-head."""
    W_q, W_k, W_v = _stack(blocks, 'W_q'), _stack(blocks, 'W_k'), _stack(blocks, 'W_v')
    L, H, E, Dh = W_q.shape

    def flat(W):                         # (L, H, E, Dh) -> (L, E, H*Dh)
        return jnp.transpose(W, (0, 2, 1, 3)).reshape(L, E, H * Dh)

    W_qkv = jnp.concatenate([flat(W_q), flat(W_k), flat(W_v)],
                            axis=-1).astype(compute_dtype)           # (L, E, 3*H*Dh)
    b_qkv = jnp.concatenate([_stack(blocks, 'b_q').reshape(L, 1, H * Dh),
                             _stack(blocks, 'b_k').reshape(L, 1, H * Dh),
                             _stack(blocks, 'b_v').reshape(L, 1, H * Dh)], axis=-1)

    params = dict(
        ln1_w=_stack(blocks, 'ln1_w'), ln1_b=_stack(blocks, 'ln1_b'),
        W_qkv=W_qkv, b_qkv=b_qkv,
        W_o=_stack(blocks, 'W_o').astype(compute_dtype),             # (L, H, Dh, E)
        b_o=_stack(blocks, 'b_o'),
        ln2_w=_stack(blocks, 'ln2_w'), ln2_b=_stack(blocks, 'ln2_b'),
        W_in=_stack(blocks, 'W_in').astype(compute_dtype), b_in=_stack(blocks, 'b_in'),
        W_out=_stack(blocks, 'W_out').astype(compute_dtype), b_out=_stack(blocks, 'b_out'),
    )
    return params, H, Dh


def run_blocks(x, blocks, lnf_w, lnf_b, *, compute_dtype=MATMUL_DTYPE):
    """All TransformerBlocks + ln_final, fused into one pallas_call."""
    B, S, E = x.shape
    p, n_heads, d_head = _prep_block_params(blocks, compute_dtype)
    L = len(blocks)
    hd = n_heads * d_head
    d_mlp = p['W_in'].shape[-1]
    # rough per-token live-f32 footprint (resid, x_ln, qkv, mid, mlp hidden, scores)
    bytes_per_row = 4 * (6 * E + 3 * hd + 3 * d_mlp + 4 * S)
    Bt = _pick_bt(B, S, bytes_per_row)

    def lspec(arr):
        nd = arr.ndim
        return pl.BlockSpec((1,) + tuple(arr.shape[1:]),
                            lambda bb, l, nd=nd: (l,) + (0,) * (nd - 1))

    weights = (p['ln1_w'], p['ln1_b'], p['W_qkv'], p['b_qkv'], p['W_o'], p['b_o'],
               p['ln2_w'], p['ln2_b'], p['W_in'], p['b_in'], p['W_out'], p['b_out'])

    kernel = functools.partial(block_kernel, ln_eps=LN_EPS, mask_eps=MASK_EPS,
                               n_heads=n_heads, d_head=d_head, bt=Bt, seq=S)

    return pl.pallas_call(
        kernel,
        out_shape=jax.ShapeDtypeStruct((B, S, E), jnp.float32),
        grid=(B // Bt, L),
        in_specs=[pl.BlockSpec((Bt, S, E), lambda bb, l: (bb, 0, 0))]
                 + [lspec(w) for w in weights]
                 + [pl.BlockSpec((1, E), lambda bb, l: (0, 0)),
                    pl.BlockSpec((1, E), lambda bb, l: (0, 0))],
        out_specs=pl.BlockSpec((Bt, S, E), lambda bb, l: (bb, 0, 0)),
        compiler_params=pltpu.CompilerParams(
            dimension_semantics=("parallel", "arbitrary"),
            vmem_limit_bytes=VMEM_LIMIT_BYTES),
    )(x, *weights, lnf_w, lnf_b)


def run_unembed(x, lnw, lnb, W_U, b_U, *, apply_ln, compute_dtype=MATMUL_DTYPE):
    B, S, E = x.shape
    V = W_U.shape[1]
    V_pad = _round_up(V, 128)            # lane-dense vocab tiles, never full-width fallback
    if V_pad != V:
        W_U = jnp.pad(W_U, ((0, 0), (0, V_pad - V)))
        b_U = jnp.pad(b_U, ((0, 0), (0, V_pad - V)))
    tile_v = _pick_vocab_tile(V_pad)
    Bt = _pick_bt(B, S, 4 * (2 * E + 3 * tile_v))
    kernel = functools.partial(unembed_kernel, ln_eps=LN_EPS, apply_ln=apply_ln)
    logits = pl.pallas_call(
        kernel,
        out_shape=jax.ShapeDtypeStruct((B, S, V_pad), jnp.float32),
        # vocab OUTER / batch inner: W_U block index constant along the inner
        # axis, so W_U is streamed from HBM exactly once.
        grid=(V_pad // tile_v, B // Bt),
        in_specs=[pl.BlockSpec((Bt, S, E), lambda v, b: (b, 0, 0)),
                  pl.BlockSpec((1, E), lambda v, b: (0, 0)),
                  pl.BlockSpec((1, E), lambda v, b: (0, 0)),
                  pl.BlockSpec((E, tile_v), lambda v, b: (0, v)),
                  pl.BlockSpec((1, tile_v), lambda v, b: (0, v))],
        out_specs=pl.BlockSpec((Bt, S, tile_v), lambda v, b: (b, 0, v)),
        compiler_params=pltpu.CompilerParams(
            dimension_semantics=("parallel", "arbitrary"),
            vmem_limit_bytes=VMEM_LIMIT_BYTES),
    )(x, lnw, lnb, W_U.astype(compute_dtype), b_U)
    return logits[..., :V] if V_pad != V else logits


def transformer_forward(tokens, params):
    # embedding gather + positional embed (glue, plain JAX)
    S = tokens.shape[1]
    resid = params['W_E'][tokens] + params['W_pos'][:S][None, :, :]
    blocks = params['blocks']
    if blocks:
        normed = run_blocks(resid, blocks, params['lnf_w'], params['lnf_b'])
        return run_unembed(normed, params['lnf_w'], params['lnf_b'],
                           params['W_U'], params['b_U'], apply_ln=False)
    return run_unembed(resid, params['lnf_w'], params['lnf_b'],
                       params['W_U'], params['b_U'], apply_ln=True)


# ------------------------------ deterministic init ------------------------------

def init_params(key, cfg):
    d_model, d_vocab, n_ctx = cfg['d_model'], cfg['d_vocab'], cfg['n_ctx']
    n_heads, d_head, d_mlp, n_layers = cfg['n_heads'], cfg['d_head'], cfg['d_mlp'], cfg['n_layers']
    keys = iter(jax.random.split(key, 4 + 6 * n_layers))
    nrm = lambda shape: INIT_RANGE * jax.random.normal(next(keys), shape, jnp.float32)
    params = {
        'W_E': nrm((d_vocab, d_model)),
        'W_pos': nrm((n_ctx, d_model)),
        'W_U': nrm((d_model, d_vocab)),
        'b_U': jnp.zeros((1, d_vocab), jnp.float32),
        'lnf_w': jnp.ones((1, d_model), jnp.float32),
        'lnf_b': jnp.zeros((1, d_model), jnp.float32),
        'blocks': [],
    }
    for _ in range(n_layers):
        params['blocks'].append({
            'ln1_w': jnp.ones((1, d_model), jnp.float32),
            'ln1_b': jnp.zeros((1, d_model), jnp.float32),
            'W_q': nrm((n_heads, d_model, d_head)),
            'W_k': nrm((n_heads, d_model, d_head)),
            'W_v': nrm((n_heads, d_model, d_head)),
            'W_o': nrm((n_heads, d_head, d_model)),
            'b_q': jnp.zeros((n_heads, d_head), jnp.float32),
            'b_k': jnp.zeros((n_heads, d_head), jnp.float32),
            'b_v': jnp.zeros((n_heads, d_head), jnp.float32),
            'b_o': jnp.zeros((1, d_model), jnp.float32),
            'ln2_w': jnp.ones((1, d_model), jnp.float32),
            'ln2_b': jnp.zeros((1, d_model), jnp.float32),
            'W_in': nrm((d_model, d_mlp)),
            'b_in': jnp.zeros((1, d_mlp), jnp.float32),
            'W_out': nrm((d_mlp, d_model)),
            'b_out': jnp.zeros((1, d_model), jnp.float32),
        })
    return params


if __name__ == "__main__":
    cfg = dict(d_vocab=64, d_model=32, n_ctx=16, n_heads=2, d_head=16,
               d_mlp=64, n_layers=2)
    key = jax.random.PRNGKey(0)
    pkey, tkey = jax.random.split(key)
    params = init_params(pkey, cfg)

    batch, seq = 2, 8
    tokens = jax.random.randint(tkey, (batch, seq), 0, cfg['d_vocab'], dtype=jnp.int32)

    logits = transformer_forward(tokens, params)
    jax.block_until_ready(logits)
    assert logits.shape == (batch, seq, cfg['d_vocab'])
    assert logits.dtype == jnp.float32
    print("KERNEL_OK")
</pallas_src>

<mosaic_0001>
module attributes {stable_mosaic.version = 11 : i64} {
  func.func @block_kernel(%arg0: i32, %arg1: i32, %arg2: memref<1x8x32xf32, #tpu.memory_space<vmem>>, %arg3: memref<1x1x32xf32, #tpu.memory_space<vmem>>, %arg4: memref<1x1x32xf32, #tpu.memory_space<vmem>>, %arg5: memref<1x32x96xbf16, #tpu.memory_space<vmem>>, %arg6: memref<1x1x96xf32, #tpu.memory_space<vmem>>, %arg7: memref<1x2x16x32xbf16, #tpu.memory_space<vmem>>, %arg8: memref<1x1x32xf32, #tpu.memory_space<vmem>>, %arg9: memref<1x1x32xf32, #tpu.memory_space<vmem>>, %arg10: memref<1x1x32xf32, #tpu.memory_space<vmem>>, %arg11: memref<1x32x64xbf16, #tpu.memory_space<vmem>>, %arg12: memref<1x1x64xf32, #tpu.memory_space<vmem>>, %arg13: memref<1x64x32xbf16, #tpu.memory_space<vmem>>, %arg14: memref<1x1x32xf32, #tpu.memory_space<vmem>>, %arg15: memref<1x32xf32, #tpu.memory_space<vmem>>, %arg16: memref<1x32xf32, #tpu.memory_space<vmem>>, %arg17: memref<1x8x32xf32, #tpu.memory_space<vmem>>) attributes {dimension_semantics = [#tpu.dimension_semantics<parallel>, #tpu.dimension_semantics<arbitrary>], iteration_bounds = array<i64: 2, 2>, scalar_prefetch = 0 : i64, scratch_operands = 0 : i64, tpu.core_type = #tpu.core_type<tc>, window_params = [{transform_indices = @transform_0, window_bounds = array<i64: 1, 8, 32>}, {transform_indices = @transform_1, window_bounds = array<i64: 1, 1, 32>}, {transform_indices = @transform_2, window_bounds = array<i64: 1, 1, 32>}, {transform_indices = @transform_3, window_bounds = array<i64: 1, 32, 96>}, {transform_indices = @transform_4, window_bounds = array<i64: 1, 1, 96>}, {transform_indices = @transform_5, window_bounds = array<i64: 1, 2, 16, 32>}, {transform_indices = @transform_6, window_bounds = array<i64: 1, 1, 32>}, {transform_indices = @transform_7, window_bounds = array<i64: 1, 1, 32>}, {transform_indices = @transform_8, window_bounds = array<i64: 1, 1, 32>}, {transform_indices = @transform_9, window_bounds = array<i64: 1, 32, 64>}, {transform_indices = @transform_10, window_bounds = array<i64: 1, 1, 64>}, {transform_indices = @transform_11, window_bounds = array<i64: 1, 64, 32>}, {transform_indices = @transform_12, window_bounds = array<i64: 1, 1, 32>}, {pipeline_mode = #tpu.pipeline_mode<synchronous>, transform_indices = @transform_13, window_bounds = array<i64: 1, 32>}, {pipeline_mode = #tpu.pipeline_mode<synchronous>, transform_indices = @transform_14, window_bounds = array<i64: 1, 32>}, {transform_indices = @transform_15, window_bounds = array<i64: 1, 8, 32>}]} {
    %c0_i32 = arith.constant 0 : i32
    %0 = arith.cmpi eq, %arg1, %c0_i32 : i32
    %1 = arith.extui %0 : i1 to i32
    %c0_i32_0 = arith.constant 0 : i32
    %2 = arith.cmpi ne, %1, %c0_i32_0 : i32
    scf.if %2 {
      %c0_76 = arith.constant 0 : index
      %c0_77 = arith.constant 0 : index
      %c0_78 = arith.constant 0 : index
      %171 = vector.load %arg2[%c0_76, %c0_77, %c0_78] : memref<1x8x32xf32, #tpu.memory_space<vmem>>, vector<1x8x32xf32>
      %c0_79 = arith.constant 0 : index
      %c0_80 = arith.constant 0 : index
      %c0_81 = arith.constant 0 : index
      %172 = vector.load %arg17[%c0_79, %c0_80, %c0_81] : memref<1x8x32xf32, #tpu.memory_space<vmem>>, vector<1x8x32xf32>
      tpu.vector_store %arg17[%c0_79, %c0_80, %c0_81], %171 {strides = array<i32>} : memref<1x8x32xf32, #tpu.memory_space<vmem>>, vector<1x8x32xf32>,
    } else {
    }
    %c0 = arith.constant 0 : index
    %c0_1 = arith.constant 0 : index
    %c0_2 = arith.constant 0 : index
    %3 = vector.load %arg17[%c0, %c0_1, %c0_2] : memref<1x8x32xf32, #tpu.memory_space<vmem>>, vector<1x8x32xf32>
    %4 = vector.shape_cast %3 : vector<1x8x32xf32> to vector<8x32xf32>
    %c0_3 = arith.constant 0 : index
    %c0_4 = arith.constant 0 : index
    %c0_5 = arith.constant 0 : index
    %5 = vector.load %arg3[%c0_3, %c0_4, %c0_5] : memref<1x1x32xf32, #tpu.memory_space<vmem>>, vector<1x1x32xf32>
    %6 = vector.shape_cast %5 : vector<1x1x32xf32> to vector<1x32xf32>
    %c0_6 = arith.constant 0 : index
    %c0_7 = arith.constant 0 : index
    %c0_8 = arith.constant 0 : index
    %7 = vector.load %arg4[%c0_6, %c0_7, %c0_8] : memref<1x1x32xf32, #tpu.memory_space<vmem>>, vector<1x1x32xf32>
    %8 = vector.shape_cast %7 : vector<1x1x32xf32> to vector<1x32xf32>
    %cst = arith.constant dense<0.000000e+00> : vector<8xf32>
    %9 = vector.multi_reduction <add>, %4, %cst [1] : vector<8x32xf32> to vector<8xf32>
    %10 = vector.shape_cast %9 : vector<8xf32> to vector<8x1xf32>
    %cst_9 = arith.constant 3.200000e+01 : f32
    %11 = vector.broadcast %cst_9 : f32 to vector<8x1xf32>
    %12 = arith.divf %10, %11 : vector<8x1xf32>
    %13 = vector.broadcast %12 : vector<8x1xf32> to vector<8x32xf32>
    %14 = arith.subf %4, %13 : vector<8x32xf32>
    %15 = arith.mulf %14, %14 : vector<8x32xf32>
    %cst_10 = arith.constant dense<0.000000e+00> : vector<8xf32>
    %16 = vector.multi_reduction <add>, %15, %cst_10 [1] : vector<8x32xf32> to vector<8xf32>
    %17 = vector.shape_cast %16 : vector<8xf32> to vector<8x1xf32>
    %cst_11 = arith.constant 3.200000e+01 : f32
    %18 = vector.broadcast %cst_11 : f32 to vector<8x1xf32>
    %19 = arith.divf %17, %18 : vector<8x1xf32>
    %20 = vector.broadcast %12 : vector<8x1xf32> to vector<8x32xf32>
    %21 = arith.subf %4, %20 : vector<8x32xf32>
    %cst_12 = arith.constant 9.99999974E-6 : f32
    %22 = vector.broadcast %cst_12 : f32 to vector<8x1xf32>
    %23 = arith.addf %19, %22 : vector<8x1xf32>
    %24 = math.rsqrt %23 : vector<8x1xf32>
    %25 = vector.broadcast %24 : vector<8x1xf32> to vector<8x32xf32>
    %26 = arith.mulf %21, %25 : vector<8x32xf32>
    %27 = vector.broadcast %6 : vector<1x32xf32> to vector<8x32xf32>
    %28 = arith.mulf %26, %27 : vector<8x32xf32>
    %29 = vector.broadcast %8 : vector<1x32xf32> to vector<8x32xf32>
    %30 = arith.addf %28, %29 : vector<8x32xf32>
    %31 = arith.truncf %30 : vector<8x32xf32> to vector<8x32xbf16>
    %c0_13 = arith.constant 0 : index
    %c0_14 = arith.constant 0 : index
    %c0_15 = arith.constant 0 : index
    %32 = vector.load %arg5[%c0_13, %c0_14, %c0_15] : memref<1x32x96xbf16, #tpu.memory_space<vmem>>, vector<1x32x96xbf16>
    %33 = vector.shape_cast %32 : vector<1x32x96xbf16> to vector<32x96xbf16>
    %cst_16 = arith.constant dense<0.000000e+00> : vector<8x96xf32>
    %34 = tpu.matmul %31, %33, %cst_16 {dimension_numbers = #tpu.dot_dimension_numbers<[1], [0], [0], [1], [0, 0, 1, 1], [], []>} : vector<8x32xbf16>, vector<32x96xbf16>, vector<8x96xf32> -> vector<8x96xf32>
    %c0_17 = arith.constant 0 : index
    %c0_18 = arith.constant 0 : index
    %c0_19 = arith.constant 0 : index
    %35 = vector.load %arg6[%c0_17, %c0_18, %c0_19] : memref<1x1x96xf32, #tpu.memory_space<vmem>>, vector<1x1x96xf32>
    %36 = vector.shape_cast %35 : vector<1x1x96xf32> to vector<1x96xf32>
    %37 = vector.broadcast %36 : vector<1x96xf32> to vector<8x96xf32>
    %38 = arith.addf %34, %37 : vector<8x96xf32>
    %39 = tpu.iota {dimensions = array<i32: 0>} : vector<8x8xi32>
    %40 = tpu.iota {dimensions = array<i32: 1>} : vector<8x8xi32>
    %41 = arith.cmpi slt, %39, %40 : vector<8x8xi32>
    %42 = vector.shape_cast %41 : vector<8x8xi1> to vector<1x8x8xi1>
    %43 = vector.extract_strided_slice %38 {offsets = [0, 0], sizes = [8, 16], strides = [1, 1]} : vector<8x96xf32> to vector<8x16xf32>
    %44 = vector.extract_strided_slice %38 {offsets = [0, 32], sizes = [8, 16], strides = [1, 1]} : vector<8x96xf32> to vector<8x16xf32>
    %45 = vector.extract_strided_slice %38 {offsets = [0, 64], sizes = [8, 16], strides = [1, 1]} : vector<8x96xf32> to vector<8x16xf32>
    %46 = vector.shape_cast %43 : vector<8x16xf32> to vector<1x8x16xf32>
    %47 = arith.truncf %46 : vector<1x8x16xf32> to vector<1x8x16xbf16>
    %48 = vector.shape_cast %44 : vector<8x16xf32> to vector<1x8x16xf32>
    %49 = arith.truncf %48 : vector<1x8x16xf32> to vector<1x8x16xbf16>
    %50 = vector.shape_cast %45 : vector<8x16xf32> to vector<1x8x16xf32>
    %51 = arith.truncf %50 : vector<1x8x16xf32> to vector<1x8x16xbf16>
    "tpu.trace_start"() <{level = 10 : i32, message = "bqd,bkd->bqk"}> : () -> ()
    %cst_20 = arith.constant dense<0.000000e+00> : vector<1x8x8xf32>
    %52 = tpu.matmul %47, %49, %cst_20 {dimension_numbers = #tpu.dot_dimension_numbers<[2], [2], [1], [1], [0, 0, 0, 1, 1, 1], [0], [0]>} : vector<1x8x16xbf16>, vector<1x8x16xbf16>, vector<1x8x8xf32> -> vector<1x8x8xf32>
    "tpu.trace_stop"() : () -> ()
    %cst_21 = arith.constant 2.500000e-01 : f32
    %53 = vector.broadcast %cst_21 : f32 to vector<1x8x8xf32>
    %54 = arith.mulf %52, %53 : vector<1x8x8xf32>
    %cst_22 = arith.constant 1.000000e-10 : f32
    %55 = vector.broadcast %cst_22 : f32 to vector<1x8x8xf32>
    %56 = arith.select %42, %55, %54 : vector<1x8x8xi1>, vector<1x8x8xf32>
    %cst_23 = arith.constant dense<0xFF800000> : vector<1x8xf32>
    %57 = vector.multi_reduction <maximumf>, %56, %cst_23 [2] : vector<1x8x8xf32> to vector<1x8xf32>
    %58 = vector.shape_cast %57 : vector<1x8xf32> to vector<1x8x1xf32>
    %59 = vector.broadcast %58 : vector<1x8x1xf32> to vector<1x8x8xf32>
    %60 = arith.subf %56, %59 : vector<1x8x8xf32>
    %61 = math.exp %60 : vector<1x8x8xf32>
    %cst_24 = arith.constant dense<0.000000e+00> : vector<1x8xf32>
    %62 = vector.multi_reduction <add>, %61, %cst_24 [2] : vector<1x8x8xf32> to vector<1x8xf32>
    %63 = vector.shape_cast %62 : vector<1x8xf32> to vector<1x8x1xf32>
    %64 = vector.broadcast %63 : vector<1x8x1xf32> to vector<1x8x8xf32>
    %65 = arith.divf %61, %64 : vector<1x8x8xf32>
    %66 = arith.truncf %65 : vector<1x8x8xf32> to vector<1x8x8xbf16>
    "tpu.trace_start"() <{level = 10 : i32, message = "bqk,bkd->bqd"}> : () -> ()
    %cst_25 = arith.constant dense<0.000000e+00> : vector<1x8x16xf32>
    %67 = tpu.matmul %66, %51, %cst_25 {dimension_numbers = #tpu.dot_dimension_numbers<[2], [1], [1], [2], [0, 0, 0, 1, 1, 2], [0], [0]>} : vector<1x8x8xbf16>, vector<1x8x16xbf16>, vector<1x8x16xf32> -> vector<1x8x16xf32>
    "tpu.trace_stop"() : () -> ()
    %68 = vector.shape_cast %67 : vector<1x8x16xf32> to vector<8x16xf32>
    %69 = arith.truncf %68 : vector<8x16xf32> to vector<8x16xbf16>
    %c0_26 = arith.constant 0 : index
    %c0_27 = arith.constant 0 : index
    %c0_28 = arith.constant 0 : index
    %c0_29 = arith.constant 0 : index
    %70 = vector.load %arg7[%c0_26, %c0_27, %c0_28, %c0_29] : memref<1x2x16x32xbf16, #tpu.memory_space<vmem>>, vector<1x1x16x32xbf16>
    %71 = vector.shape_cast %70 : vector<1x1x16x32xbf16> to vector<16x32xbf16>
    %cst_30 = arith.constant dense<0.000000e+00> : vector<8x32xf32>
    %72 = tpu.matmul %69, %71, %cst_30 {dimension_numbers = #tpu.dot_dimension_numbers<[1], [0], [0], [1], [0, 0, 1, 1], [], []>} : vector<8x16xbf16>, vector<16x32xbf16>, vector<8x32xf32> -> vector<8x32xf32>
    %73 = vector.extract_strided_slice %38 {offsets = [0, 16], sizes = [8, 16], strides = [1, 1]} : vector<8x96xf32> to vector<8x16xf32>
    %74 = vector.extract_strided_slice %38 {offsets = [0, 48], sizes = [8, 16], strides = [1, 1]} : vector<8x96xf32> to vector<8x16xf32>
    %75 = vector.extract_strided_slice %38 {offsets = [0, 80], sizes = [8, 16], strides = [1, 1]} : vector<8x96xf32> to vector<8x16xf32>
    %76 = vector.shape_cast %73 : vector<8x16xf32> to vector<1x8x16xf32>
    %77 = arith.truncf %76 : vector<1x8x16xf32> to vector<1x8x16xbf16>
    %78 = vector.shape_cast %74 : vector<8x16xf32> to vector<1x8x16xf32>
    %79 = arith.truncf %78 : vector<1x8x16xf32> to vector<1x8x16xbf16>
    %80 = vector.shape_cast %75 : vector<8x16xf32> to vector<1x8x16xf32>
    %81 = arith.truncf %80 : vector<1x8x16xf32> to vector<1x8x16xbf16>
    "tpu.trace_start"() <{level = 10 : i32, message = "bqd,bkd->bqk"}> : () -> ()
    %cst_31 = arith.constant dense<0.000000e+00> : vector<1x8x8xf32>
    %82 = tpu.matmul %77, %79, %cst_31 {dimension_numbers = #tpu.dot_dimension_numbers<[2], [2], [1], [1], [0, 0, 0, 1, 1, 1], [0], [0]>} : vector<1x8x16xbf16>, vector<1x8x16xbf16>, vector<1x8x8xf32> -> vector<1x8x8xf32>
    "tpu.trace_stop"() : () -> ()
    %cst_32 = arith.constant 2.500000e-01 : f32
    %83 = vector.broadcast %cst_32 : f32 to vector<1x8x8xf32>
    %84 = arith.mulf %82, %83 : vector<1x8x8xf32>
    %cst_33 = arith.constant 1.000000e-10 : f32
    %85 = vector.broadcast %cst_33 : f32 to vector<1x8x8xf32>
    %86 = arith.select %42, %85, %84 : vector<1x8x8xi1>, vector<1x8x8xf32>
    %cst_34 = arith.constant dense<0xFF800000> : vector<1x8xf32>
    %87 = vector.multi_reduction <maximumf>, %86, %cst_34 [2] : vector<1x8x8xf32> to vector<1x8xf32>
    %88 = vector.shape_cast %87 : vector<1x8xf32> to vector<1x8x1xf32>
    %89 = vector.broadcast %88 : vector<1x8x1xf32> to vector<1x8x8xf32>
    %90 = arith.subf %86, %89 : vector<1x8x8xf32>
    %91 = math.exp %90 : vector<1x8x8xf32>
    %cst_35 = arith.constant dense<0.000000e+00> : vector<1x8xf32>
    %92 = vector.multi_reduction <add>, %91, %cst_35 [2] : vector<1x8x8xf32> to vector<1x8xf32>
    %93 = vector.shape_cast %92 : vector<1x8xf32> to vector<1x8x1xf32>
    %94 = vector.broadcast %93 : vector<1x8x1xf32> to vector<1x8x8xf32>
    %95 = arith.divf %91, %94 : vector<1x8x8xf32>
    %96 = arith.truncf %95 : vector<1x8x8xf32> to vector<1x8x8xbf16>
    "tpu.trace_start"() <{level = 10 : i32, message = "bqk,bkd->bqd"}> : () -> ()
    %cst_36 = arith.constant dense<0.000000e+00> : vector<1x8x16xf32>
    %97 = tpu.matmul %96, %81, %cst_36 {dimension_numbers = #tpu.dot_dimension_numbers<[2], [1], [1], [2], [0, 0, 0, 1, 1, 2], [0], [0]>} : vector<1x8x8xbf16>, vector<1x8x16xbf16>, vector<1x8x16xf32> -> vector<1x8x16xf32>
    "tpu.trace_stop"() : () -> ()
    %98 = vector.shape_cast %97 : vector<1x8x16xf32> to vector<8x16xf32>
    %99 = arith.truncf %98 : vector<8x16xf32> to vector<8x16xbf16>
    %c0_37 = arith.constant 0 : index
    %c1 = arith.constant 1 : index
    %c0_38 = arith.constant 0 : index
    %c0_39 = arith.constant 0 : index
    %100 = vector.load %arg7[%c0_37, %c1, %c0_38, %c0_39] : memref<1x2x16x32xbf16, #tpu.memory_space<vmem>>, vector<1x1x16x32xbf16>
    %101 = vector.shape_cast %100 : vector<1x1x16x32xbf16> to vector<16x32xbf16>
    %cst_40 = arith.constant dense<0.000000e+00> : vector<8x32xf32>
    %102 = tpu.matmul %99, %101, %cst_40 {dimension_numbers = #tpu.dot_dimension_numbers<[1], [0], [0], [1], [0, 0, 1, 1], [], []>} : vector<8x16xbf16>, vector<16x32xbf16>, vector<8x32xf32> -> vector<8x32xf32>
    %103 = arith.addf %72, %102 : vector<8x32xf32>
    %c0_41 = arith.constant 0 : index
    %c0_42 = arith.constant 0 : index
    %c0_43 = arith.constant 0 : index
    %104 = vector.load %arg8[%c0_41, %c0_42, %c0_43] : memref<1x1x32xf32, #tpu.memory_space<vmem>>, vector<1x1x32xf32>
    %105 = vector.shape_cast %104 : vector<1x1x32xf32> to vector<1x32xf32>
    %106 = vector.broadcast %105 : vector<1x32xf32> to vector<8x32xf32>
    %107 = arith.addf %103, %106 : vector<8x32xf32>
    %108 = arith.addf %107, %4 : vector<8x32xf32>
    %c0_44 = arith.constant 0 : index
    %c0_45 = arith.constant 0 : index
    %c0_46 = arith.constant 0 : index
    %109 = vector.load %arg9[%c0_44, %c0_45, %c0_46] : memref<1x1x32xf32, #tpu.memory_space<vmem>>, vector<1x1x32xf32>
    %110 = vector.shape_cast %109 : vector<1x1x32xf32> to vector<1x32xf32>
    %c0_47 = arith.constant 0 : index
    %c0_48 = arith.constant 0 : index
    %c0_49 = arith.constant 0 : index
    %111 = vector.load %arg10[%c0_47, %c0_48, %c0_49] : memref<1x1x32xf32, #tpu.memory_space<vmem>>, vector<1x1x32xf32>
    %112 = vector.shape_cast %111 : vector<1x1x32xf32> to vector<1x32xf32>
    %cst_50 = arith.constant dense<0.000000e+00> : vector<8xf32>
    %113 = vector.multi_reduction <add>, %108, %cst_50 [1] : vector<8x32xf32> to vector<8xf32>
    %114 = vector.shape_cast %113 : vector<8xf32> to vector<8x1xf32>
    %cst_51 = arith.constant 3.200000e+01 : f32
    %115 = vector.broadcast %cst_51 : f32 to vector<8x1xf32>
    %116 = arith.divf %114, %115 : vector<8x1xf32>
    %117 = vector.broadcast %116 : vector<8x1xf32> to vector<8x32xf32>
    %118 = arith.subf %108, %117 : vector<8x32xf32>
    %119 = arith.mulf %118, %118 : vector<8x32xf32>
    %cst_52 = arith.constant dense<0.000000e+00> : vector<8xf32>
    %120 = vector.multi_reduction <add>, %119, %cst_52 [1] : vector<8x32xf32> to vector<8xf32>
    %121 = vector.shape_cast %120 : vector<8xf32> to vector<8x1xf32>
    %cst_53 = arith.constant 3.200000e+01 : f32
    %122 = vector.broadcast %cst_53 : f32 to vector<8x1xf32>
    %123 = arith.divf %121, %122 : vector<8x1xf32>
    %124 = vector.broadcast %116 : vector<8x1xf32> to vector<8x32xf32>
    %125 = arith.subf %108, %124 : vector<8x32xf32>
    %cst_54 = arith.constant 9.99999974E-6 : f32
    %126 = vector.broadcast %cst_54 : f32 to vector<8x1xf32>
    %127 = arith.addf %123, %126 : vector<8x1xf32>
    %128 = math.rsqrt %127 : vector<8x1xf32>
    %129 = vector.broadcast %128 : vector<8x1xf32> to vector<8x32xf32>
    %130 = arith.mulf %125, %129 : vector<8x32xf32>
    %131 = vector.broadcast %110 : vector<1x32xf32> to vector<8x32xf32>
    %132 = arith.mulf %130, %131 : vector<8x32xf32>
    %133 = vector.broadcast %112 : vector<1x32xf32> to vector<8x32xf32>
    %134 = arith.addf %132, %133 : vector<8x32xf32>
    %135 = arith.truncf %134 : vector<8x32xf32> to vector<8x32xbf16>
    %c0_55 = arith.constant 0 : index
    %c0_56 = arith.constant 0 : index
    %c0_57 = arith.constant 0 : index
    %136 = vector.load %arg11[%c0_55, %c0_56, %c0_57] : memref<1x32x64xbf16, #tpu.memory_space<vmem>>, vector<1x32x64xbf16>
    %137 = vector.shape_cast %136 : vector<1x32x64xbf16> to vector<32x64xbf16>
    %cst_58 = arith.constant dense<0.000000e+00> : vector<8x64xf32>
    %138 = tpu.matmul %135, %137, %cst_58 {dimension_numbers = #tpu.dot_dimension_numbers<[1], [0], [0], [1], [0, 0, 1, 1], [], []>} : vector<8x32xbf16>, vector<32x64xbf16>, vector<8x64xf32> -> vector<8x64xf32>
    %c0_59 = arith.constant 0 : index
    %c0_60 = arith.constant 0 : index
    %c0_61 = arith.constant 0 : index
    %139 = vector.load %arg12[%c0_59, %c0_60, %c0_61] : memref<1x1x64xf32, #tpu.memory_space<vmem>>, vector<1x1x64xf32>
    %140 = vector.shape_cast %139 : vector<1x1x64xf32> to vector<1x64xf32>
    %141 = vector.broadcast %140 : vector<1x64xf32> to vector<8x64xf32>
    %142 = arith.addf %138, %141 : vector<8x64xf32>
    %cst_62 = arith.constant 5.000000e-01 : f32
    %143 = vector.broadcast %cst_62 : f32 to vector<8x64xf32>
    %144 = arith.mulf %143, %142 : vector<8x64xf32>
    %cst_63 = arith.constant 4.471500e-02 : f32
    %145 = vector.broadcast %cst_63 : f32 to vector<8x64xf32>
    %146 = arith.mulf %145, %142 : vector<8x64xf32>
    %147 = arith.mulf %146, %142 : vector<8x64xf32>
    %148 = arith.mulf %147, %142 : vector<8x64xf32>
    %149 = arith.addf %142, %148 : vector<8x64xf32>
    %cst_64 = arith.constant 0.797884583 : f32
    %150 = vector.broadcast %cst_64 : f32 to vector<8x64xf32>
    %151 = arith.mulf %150, %149 : vector<8x64xf32>
    %152 = math.tanh %151 : vector<8x64xf32>
    %cst_65 = arith.constant 1.000000e+00 : f32
    %153 = vector.broadcast %cst_65 : f32 to vector<8x64xf32>
    %154 = arith.addf %153, %152 : vector<8x64xf32>
    %155 = arith.mulf %144, %154 : vector<8x64xf32>
    %156 = arith.truncf %155 : vector<8x64xf32> to vector<8x64xbf16>
    %c0_66 = arith.constant 0 : index
    %c0_67 = arith.constant 0 : index
    %c0_68 = arith.constant 0 : index
    %157 = vector.load %arg13[%c0_66, %c0_67, %c0_68] : memref<1x64x32xbf16, #tpu.memory_space<vmem>>, vector<1x64x32xbf16>
    %158 = vector.shape_cast %157 : vector<1x64x32xbf16> to vector<64x32xbf16>
    %cst_69 = arith.constant dense<0.000000e+00> : vector<8x32xf32>
    %159 = tpu.matmul %156, %158, %cst_69 {dimension_numbers = #tpu.dot_dimension_numbers<[1], [0], [0], [1], [0, 0, 1, 1], [], []>} : vector<8x64xbf16>, vector<64x32xbf16>, vector<8x32xf32> -> vector<8x32xf32>
    %c0_70 = arith.constant 0 : index
    %c0_71 = arith.constant 0 : index
    %c0_72 = arith.constant 0 : index
    %160 = vector.load %arg14[%c0_70, %c0_71, %c0_72] : memref<1x1x32xf32, #tpu.memory_space<vmem>>, vector<1x1x32xf32>
    %161 = vector.shape_cast %160 : vector<1x1x32xf32> to vector<1x32xf32>
    %162 = vector.broadcast %161 : vector<1x32xf32> to vector<8x32xf32>
    %163 = arith.addf %159, %162 : vector<8x32xf32>
    %164 = arith.addf %163, %108 : vector<8x32xf32>
    %c1_i32 = arith.constant 1 : i32
    %165 = arith.cmpi slt, %arg1, %c1_i32 : i32
    %166 = arith.extui %165 : i1 to i32
    %c0_i32_73 = arith.constant 0 : i32
    %167 = arith.cmpi ne, %166, %c0_i32_73 : i32
    scf.if %167 {
      %171 = vector.shape_cast %164 : vector<8x32xf32> to vector<1x8x32xf32>
      %c0_76 = arith.constant 0 : index
      %c0_77 = arith.constant 0 : index
      %c0_78 = arith.constant 0 : index
      %172 = vector.load %arg17[%c0_76, %c0_77, %c0_78] : memref<1x8x32xf32, #tpu.memory_space<vmem>>, vector<1x8x32xf32>
      tpu.vector_store %arg17[%c0_76, %c0_77, %c0_78], %171 {strides = array<i32>} : memref<1x8x32xf32, #tpu.memory_space<vmem>>, vector<1x8x32xf32>,
    } else {
    }
    %c1_i32_74 = arith.constant 1 : i32
    %168 = arith.cmpi eq, %arg1, %c1_i32_74 : i32
    %169 = arith.extui %168 : i1 to i32
    %c0_i32_75 = arith.constant 0 : i32
    %170 = arith.cmpi ne, %169, %c0_i32_75 : i32
    scf.if %170 {
      %c0_76 = arith.constant 0 : index
      %c0_77 = arith.constant 0 : index
      %171 = vector.load %arg15[%c0_76, %c0_77] : memref<1x32xf32, #tpu.memory_space<vmem>>, vector<1x32xf32>
      %c0_78 = arith.constant 0 : index
      %c0_79 = arith.constant 0 : index
      %172 = vector.load %arg16[%c0_78, %c0_79] : memref<1x32xf32, #tpu.memory_space<vmem>>, vector<1x32xf32>
      %cst_80 = arith.constant dense<0.000000e+00> : vector<8xf32>
      %173 = vector.multi_reduction <add>, %164, %cst_80 [1] : vector<8x32xf32> to vector<8xf32>
      %174 = vector.shape_cast %173 : vector<8xf32> to vector<8x1xf32>
      %cst_81 = arith.constant 3.200000e+01 : f32
      %175 = vector.broadcast %cst_81 : f32 to vector<8x1xf32>
      %176 = arith.divf %174, %175 : vector<8x1xf32>
      %177 = vector.broadcast %176 : vector<8x1xf32> to vector<8x32xf32>
      %178 = arith.subf %164, %177 : vector<8x32xf32>
      %179 = arith.mulf %178, %178 : vector<8x32xf32>
      %cst_82 = arith.constant dense<0.000000e+00> : vector<8xf32>
      %180 = vector.multi_reduction <add>, %179, %cst_82 [1] : vector<8x32xf32> to vector<8xf32>
      %181 = vector.shape_cast %180 : vector<8xf32> to vector<8x1xf32>
      %cst_83 = arith.constant 3.200000e+01 : f32
      %182 = vector.broadcast %cst_83 : f32 to vector<8x1xf32>
      %183 = arith.divf %181, %182 : vector<8x1xf32>
      %184 = vector.broadcast %176 : vector<8x1xf32> to vector<8x32xf32>
      %185 = arith.subf %164, %184 : vector<8x32xf32>
      %cst_84 = arith.constant 9.99999974E-6 : f32
      %186 = vector.broadcast %cst_84 : f32 to vector<8x1xf32>
      %187 = arith.addf %183, %186 : vector<8x1xf32>
      %188 = math.rsqrt %187 : vector<8x1xf32>
      %189 = vector.broadcast %188 : vector<8x1xf32> to vector<8x32xf32>
      %190 = arith.mulf %185, %189 : vector<8x32xf32>
      %191 = vector.broadcast %171 : vector<1x32xf32> to vector<8x32xf32>
      %192 = arith.mulf %190, %191 : vector<8x32xf32>
      %193 = vector.broadcast %172 : vector<1x32xf32> to vector<8x32xf32>
      %194 = arith.addf %192, %193 : vector<8x32xf32>
      %195 = vector.shape_cast %194 : vector<8x32xf32> to vector<1x8x32xf32>
      %c0_85 = arith.constant 0 : index
      %c0_86 = arith.constant 0 : index
      %c0_87 = arith.constant 0 : index
      %196 = vector.load %arg17[%c0_85, %c0_86, %c0_87] : memref<1x8x32xf32, #tpu.memory_space<vmem>>, vector<1x8x32xf32>
      tpu.vector_store %arg17[%c0_85, %c0_86, %c0_87], %195 {strides = array<i32>} : memref<1x8x32xf32, #tpu.memory_space<vmem>>, vector<1x8x32xf32>,
    } else {
    }
    return
  }
  func.func @transform_0(%arg0: i32, %arg1: i32) -> (i32, i32, i32) {
    %c0_i32 = arith.constant 0 : i32
    %c0_i32_0 = arith.constant 0 : i32
    %c0_i32_1 = arith.constant 0 : i32
    return %arg0, %c0_i32, %c0_i32_0 : i32, i32, i32
  }
  func.func @transform_1(%arg0: i32, %arg1: i32) -> (i32, i32, i32) {
    %c0_i32 = arith.constant 0 : i32
    %c0_i32_0 = arith.constant 0 : i32
    %c0_i32_1 = arith.constant 0 : i32
    return %arg1, %c0_i32, %c0_i32_0 : i32, i32, i32
  }
  func.func @transform_2(%arg0: i32, %arg1: i32) -> (i32, i32, i32) {
    %c0_i32 = arith.constant 0 : i32
    %c0_i32_0 = arith.constant 0 : i32
    %c0_i32_1 = arith.constant 0 : i32
    return %arg1, %c0_i32, %c0_i32_0 : i32, i32, i32
  }
  func.func @transform_3(%arg0: i32, %arg1: i32) -> (i32, i32, i32) {
    %c0_i32 = arith.constant 0 : i32
    %c0_i32_0 = arith.constant 0 : i32
    %c0_i32_1 = arith.constant 0 : i32
    return %arg1, %c0_i32, %c0_i32_0 : i32, i32, i32
  }
  func.func @transform_4(%arg0: i32, %arg1: i32) -> (i32, i32, i32) {
    %c0_i32 = arith.constant 0 : i32
    %c0_i32_0 = arith.constant 0 : i32
    %c0_i32_1 = arith.constant 0 : i32
    return %arg1, %c0_i32, %c0_i32_0 : i32, i32, i32
  }
  func.func @transform_5(%arg0: i32, %arg1: i32) -> (i32, i32, i32, i32) {
    %c0_i32 = arith.constant 0 : i32
    %c0_i32_0 = arith.constant 0 : i32
    %c0_i32_1 = arith.constant 0 : i32
    %c0_i32_2 = arith.constant 0 : i32
    return %arg1, %c0_i32, %c0_i32_0, %c0_i32_1 : i32, i32, i32, i32
  }
  func.func @transform_6(%arg0: i32, %arg1: i32) -> (i32, i32, i32) {
    %c0_i32 = arith.constant 0 : i32
    %c0_i32_0 = arith.constant 0 : i32
    %c0_i32_1 = arith.constant 0 : i32
    return %arg1, %c0_i32, %c0_i32_0 : i32, i32, i32
  }
  func.func @transform_7(%arg0: i32, %arg1: i32) -> (i32, i32, i32) {
    %c0_i32 = arith.constant 0 : i32
    %c0_i32_0 = arith.constant 0 : i32
    %c0_i32_1 = arith.constant 0 : i32
    return %arg1, %c0_i32, %c0_i32_0 : i32, i32, i32
  }
  func.func @transform_8(%arg0: i32, %arg1: i32) -> (i32, i32, i32) {
    %c0_i32 = arith.constant 0 : i32
    %c0_i32_0 = arith.constant 0 : i32
    %c0_i32_1 = arith.constant 0 : i32
    return %arg1, %c0_i32, %c0_i32_0 : i32, i32, i32
  }
  func.func @transform_9(%arg0: i32, %arg1: i32) -> (i32, i32, i32) {
    %c0_i32 = arith.constant 0 : i32
    %c0_i32_0 = arith.constant 0 : i32
    %c0_i32_1 = arith.constant 0 : i32
    return %arg1, %c0_i32, %c0_i32_0 : i32, i32, i32
  }
  func.func @transform_10(%arg0: i32, %arg1: i32) -> (i32, i32, i32) {
    %c0_i32 = arith.constant 0 : i32
    %c0_i32_0 = arith.constant 0 : i32
    %c0_i32_1 = arith.constant 0 : i32
    return %arg1, %c0_i32, %c0_i32_0 : i32, i32, i32
  }
  func.func @transform_11(%arg0: i32, %arg1: i32) -> (i32, i32, i32) {
    %c0_i32 = arith.constant 0 : i32
    %c0_i32_0 = arith.constant 0 : i32
    %c0_i32_1 = arith.constant 0 : i32
    return %arg1, %c0_i32, %c0_i32_0 : i32, i32, i32
  }
  func.func @transform_12(%arg0: i32, %arg1: i32) -> (i32, i32, i32) {
    %c0_i32 = arith.constant 0 : i32
    %c0_i32_0 = arith.constant 0 : i32
    %c0_i32_1 = arith.constant 0 : i32
    return %arg1, %c0_i32, %c0_i32_0 : i32, i32, i32
  }
  func.func @transform_13(%arg0: i32, %arg1: i32) -> (i32, i32) {
    %c0_i32 = arith.constant 0 : i32
    %c0_i32_0 = arith.constant 0 : i32
    %c0_i32_1 = arith.constant 0 : i32
    return %c0_i32, %c0_i32_0 : i32, i32
  }
  func.func @transform_14(%arg0: i32, %arg1: i32) -> (i32, i32) {
    %c0_i32 = arith.constant 0 : i32
    %c0_i32_0 = arith.constant 0 : i32
    %c0_i32_1 = arith.constant 0 : i32
    return %c0_i32, %c0_i32_0 : i32, i32
  }
  func.func @transform_15(%arg0: i32, %arg1: i32) -> (i32, i32, i32) {
    %c0_i32 = arith.constant 0 : i32
    %c0_i32_0 = arith.constant 0 : i32
    %c0_i32_1 = arith.constant 0 : i32
    return %arg0, %c0_i32, %c0_i32_0 : i32, i32, i32
  }
}

</mosaic_0001>

<llo_original>
// kernel: tpu_custom_call.1
$region0: #{tpu_custom_call.1}
  #allocation0 [shape = 'u32[]', space=smem, size = 0x4, offset = 0x4, fixed_abs, tag = 'smem constant byte address 0x4 - core index']
  #allocation1 [shape = 'u32[144,128]{1,0:T(1,128)}', space=vmem, size = 0x12000, scoped, tag = 'internal scratch']
  %s0 = inlined_call_operand.hbm [shape: f32[2,8,32], index: 0, kind: input, shape index: {}]
  %s1 = inlined_call_operand.vmem [shape: f32[2,1,32], index: 1, kind: input, shape index: {}]
  %s2 = inlined_call_operand.vmem [shape: f32[2,1,32], index: 2, kind: input, shape index: {}]
  %s3 = inlined_call_operand.vmem [shape: bf16[2,32,96], index: 3, kind: input, shape index: {}]
  %s4 = inlined_call_operand.vmem [shape: f32[2,1,96], index: 4, kind: input, shape index: {}]
  %s5 = inlined_call_operand.vmem [shape: bf16[2,2,16,32], index: 5, kind: input, shape index: {}]
  %s6 = inlined_call_operand.vmem [shape: f32[2,1,32], index: 6, kind: input, shape index: {}]
  %s7 = inlined_call_operand.hbm [shape: f32[2,1,32], index: 7, kind: input, shape index: {}]
  %s8 = inlined_call_operand.hbm [shape: f32[2,1,32], index: 8, kind: input, shape index: {}]
  %s9 = inlined_call_operand.vmem [shape: bf16[2,32,64], index: 9, kind: input, shape index: {}]
  %s10 = inlined_call_operand.hbm [shape: f32[2,1,64], index: 10, kind: input, shape index: {}]
  %s11 = inlined_call_operand.vmem [shape: bf16[2,64,32], index: 11, kind: input, shape index: {}]
  %s12 = inlined_call_operand.vmem [shape: f32[2,1,32], index: 12, kind: input, shape index: {}]
  %s13 = inlined_call_operand.vmem [shape: f32[1,32], index: 13, kind: input, shape index: {}]
  %s14 = inlined_call_operand.vmem [shape: f32[1,32], index: 14, kind: input, shape index: {}]
  %s15 = inlined_call_operand.hbm [shape: f32[2,8,32], index: 15, kind: output, shape index: {}]
  %s16 = sld [smem:[#allocation0]]
  $region121: #{tpu_custom_call.1} parent=0
    _
  %s18 = ssub.s32 1, %s16
  %s19 = scalar_select 0, %s18, %s16
  $region1: #{tpu_custom_call.1} parent=0
    #allocation2 [shape = 'u8[8192]{0}', space=vmem, size = 0x2000, scoped, tag = 'input window, operand 0']
    #allocation3 [shape = 's32[2]{0}', space=sflag, size = 0x8, scoped, tag = 'scoped memory for tpu_custom_call.1']
    #allocation4 [shape = 's32[2]{0}', space=sflag, size = 0x8, scoped, tag = 'scoped memory for tpu_custom_call.1']
    #allocation5 [shape = 'u8[1024]{0}', space=vmem, size = 0x400, scoped, tag = 'input window, operand 7']
    #allocation6 [shape = 's32[2]{0}', space=sflag, size = 0x8, scoped, tag = 'scoped memory for tpu_custom_call.1']
    #allocation7 [shape = 'u8[1024]{0}', space=vmem, size = 0x400, scoped, tag = 'input window, operand 8']
    #allocation8 [shape = 'u8[1024]{0}', space=vmem, size = 0x400, scoped, tag = 'input window, operand 10']
    #allocation9 [shape = 's32[2]{0}', space=sflag, size = 0x8, scoped, tag = 'scoped memory for tpu_custom_call.1']
    #allocation10 [shape = 'u8[8192]{0}', space=vmem, size = 0x2000, scoped, tag = 'output window, operand 0']
    %20 = vsyncpa [#allocation3], 0
    %s21 = scalar_lea.sflag [#allocation3], 1
    %22 = vsyncpa %s21, 0
    %23 = vsyncpa [#allocation6], 0
    %s24 = scalar_lea.sflag [#allocation6], 1
    %25 = vsyncpa %s24, 0
    %26 = vsyncpa [#allocation9], 0
    %s27 = scalar_lea.sflag [#allocation9], 1
    %28 = vsyncpa %s27, 0
    %29 = vsyncpa [#allocation4], 0
    %s30 = scalar_lea.sflag [#allocation4], 1
    %31 = vsyncpa %s30, 0
    loop: start=0, step=1, limit=6
    $region2: #{tpu_custom_call.1} parent=1 // loop_pre_header
      _
    $region3: #{tpu_custom_call.1} parent=1 // loop_header
      %s33 = sphi 0, %s37
      %p34 = scmp.ge.s32.totalorder %s33, 6
      %s40 = sphi 0, %s52
      %s41 = sphi 0, %s48
      %s42 = sphi 0, %s40
      %s43 = sphi 0, %s41
      %s44 = sphi 0, %s42
      %s45 = sphi 0, %s43
      %s55 = sphi 0, %s57
      %s58 = sphi 0, %s55
      %s59 = sphi 0, %s58
      %s75 = sphi 0, %s59
      %s81 = sphi 0, %s83
      %s84 = sphi 0, %s81
      %s85 = sphi 0, %s84
      %s101 = sphi 0, %s85
      %s107 = sphi 0, %s109
      %s110 = sphi 0, %s107
      %s111 = sphi 0, %s110
      %s127 = sphi 0, %s111
      %s133 = sphi 0, %s135
      %s136 = sphi 0, %s133
      %s137 = sphi 0, %s136
      %s153 = sphi 0, %s137
      %s159 = sphi 0, %s161
      %s162 = sphi 0, %s159
      %s163 = sphi 0, %s162
      %s179 = sphi 0, %s163
      %s185 = sphi 0, %s187
      %s188 = sphi 0, %s185
      %s189 = sphi 0, %s188
      %s205 = sphi 0, %s189
      %s211 = sphi 0, %s213
      %s214 = sphi 0, %s211
      %s215 = sphi 0, %s214
      %s231 = sphi 0, %s215
      %s237 = sphi 0, %s239
      %s240 = sphi 0, %s237
      %s241 = sphi 0, %s240
      %s257 = sphi 0, %s241
      %s263 = sphi 0, %s265
      %s266 = sphi 0, %s263
      %s267 = sphi 0, %s266
      %s283 = sphi 0, %s267
      %s289 = sphi 0, %s291
      %s292 = sphi 0, %s289
      %s293 = sphi 0, %s292
      %s309 = sphi 0, %s293
      %s315 = sphi 0, %s317
      %s318 = sphi 0, %s315
      %s319 = sphi 0, %s318
      %s335 = sphi 0, %s319
      %s341 = sphi 0, %s343
      %s344 = sphi 0, %s341
      %s345 = sphi 0, %s344
      %s361 = sphi 0, %s345
      %s367 = sphi 0, %s369
      %s370 = sphi 0, %s367
      %s371 = sphi 0, %s370
      %s387 = sphi 0, %s371
      %s391 = sphi 0, %s391
      %s393 = sphi 0, %s391
      %s394 = sphi 0, %s393
      %s408 = sphi 0, %s394
      %s412 = sphi 0, %s412
      %s414 = sphi 0, %s412
      %s415 = sphi 0, %s414
      %s429 = sphi 0, %s415
      %s435 = sphi 0, %s437
      %s438 = sphi 0, %s435
      %s439 = sphi 0, %s438
      %s455 = sphi 0, %s439
    $region4: #{tpu_custom_call.1} parent=1 // loop_header_branch
      %36 = sbr.rel (%p34) target = $region8
    $region5: #{tpu_custom_call.1} parent=1 // loop_body
      %s38 = ssub.s32 %s33, 1
      %s39 = ssub.s32 %s33, 2
      %s46 = sadd.s32 1, %s41
      %p47 = scmp.ge.s32.totalorder %s46, 2
      %s48 = scalar_select %p47, 0, %s46
      %s49 = sadd.s32 1, %s40
      %s50 = scalar_select %p47, %s49, %s40
      %p51 = scmp.ge.s32.totalorder %s50, 2
      %s52 = scalar_select %p51, 0, %s50
      %s53 = ssub.s32 %s40, %s52
      %p54 = scmp.eq.s32.totalorder %s53, 0
      %s56 = sadd.s32 %s55, 1
      %s57 = scalar_select %p54, %s55, %s56
      %p60 = pneg %p54
      %p61 = scmp.eq.s32.totalorder %s33, 3
      %p62 = por %p60, %p61
      %p63 = scmp.ne.s32.totalorder %s55, %s58
      %p64 = scmp.eq.s32.totalorder %s33, 0
      %p65 = por %p63, %p64
      %p66 = scmp.ne.s32.totalorder %s55, %s58
      %p67 = scmp.eq.s32.totalorder %s38, 3
      %p68 = por %p66, %p67
      %p69 = scmp.ne.s32.totalorder %s58, %s59
      %p70 = scmp.eq.s32.totalorder %s38, 0
      %p71 = por %p69, %p70
      %p72 = scmp.ne.s32.totalorder %s58, %s59
      %p73 = scmp.eq.s32.totalorder %s39, 3
      %p74 = por %p72, %p73
      %p76 = scmp.ne.s32.totalorder %s59, %s75
      %p77 = scmp.eq.s32.totalorder %s39, 0
      %p78 = por %p76, %p77
      %s79 = ssub.s32 %s41, %s48
      %p80 = scmp.eq.s32.totalorder %s79, 0
      %s82 = sadd.s32 %s81, 1
      %s83 = scalar_select %p80, %s81, %s82
      %p86 = pneg %p80
      %p87 = scmp.eq.s32.totalorder %s33, 3
      %p88 = por %p86, %p87
      %p89 = scmp.ne.s32.totalorder %s81, %s84
      %p90 = scmp.eq.s32.totalorder %s33, 0
      %p91 = por %p89, %p90
      %p92 = scmp.ne.s32.totalorder %s81, %s84
      %p93 = scmp.eq.s32.totalorder %s38, 3
      %p94 = por %p92, %p93
      %p95 = scmp.ne.s32.totalorder %s84, %s85
      %p96 = scmp.eq.s32.totalorder %s38, 0
      %p97 = por %p95, %p96
      %p98 = scmp.ne.s32.totalorder %s84, %s85
      %p99 = scmp.eq.s32.totalorder %s39, 3
      %p100 = por %p98, %p99
      %p102 = scmp.ne.s32.totalorder %s85, %s101
      %p103 = scmp.eq.s32.totalorder %s39, 0
      %p104 = por %p102, %p103
      %s105 = ssub.s32 %s41, %s48
      %p106 = scmp.eq.s32.totalorder %s105, 0
      %s108 = sadd.s32 %s107, 1
      %s109 = scalar_select %p106, %s107, %s108
      %p112 = pneg %p106
      %p113 = scmp.eq.s32.totalorder %s33, 3
      %p114 = por %p112, %p113
      %p115 = scmp.ne.s32.totalorder %s107, %s110
      %p116 = scmp.eq.s32.totalorder %s33, 0
      %p117 = por %p115, %p116
      %p118 = scmp.ne.s32.totalorder %s107, %s110
      %p119 = scmp.eq.s32.totalorder %s38, 3
      %p120 = por %p118, %p119
      %p121 = scmp.ne.s32.totalorder %s110, %s111
      %p122 = scmp.eq.s32.totalorder %s38, 0
      %p123 = por %p121, %p122
      %p124 = scmp.ne.s32.totalorder %s110, %s111
      %p125 = scmp.eq.s32.totalorder %s39, 3
      %p126 = por %p124, %p125
      %p128 = scmp.ne.s32.totalorder %s111, %s127
      %p129 = scmp.eq.s32.totalorder %s39, 0
      %p130 = por %p128, %p129
      %s131 = ssub.s32 %s41, %s48
      %p132 = scmp.eq.s32.totalorder %s131, 0
      %s134 = sadd.s32 %s133, 1
      %s135 = scalar_select %p132, %s133, %s134
      %p138 = pneg %p132
      %p139 = scmp.eq.s32.totalorder %s33, 3
      %p140 = por %p138, %p139
      %p141 = scmp.ne.s32.totalorder %s133, %s136
      %p142 = scmp.eq.s32.totalorder %s33, 0
      %p143 = por %p141, %p142
      %p144 = scmp.ne.s32.totalorder %s133, %s136
      %p145 = scmp.eq.s32.totalorder %s38, 3
      %p146 = por %p144, %p145
      %p147 = scmp.ne.s32.totalorder %s136, %s137
      %p148 = scmp.eq.s32.totalorder %s38, 0
      %p149 = por %p147, %p148
      %p150 = scmp.ne.s32.totalorder %s136, %s137
      %p151 = scmp.eq.s32.totalorder %s39, 3
      %p152 = por %p150, %p151
      %p154 = scmp.ne.s32.totalorder %s137, %s153
      %p155 = scmp.eq.s32.totalorder %s39, 0
      %p156 = por %p154, %p155
      %s157 = ssub.s32 %s41, %s48
      %p158 = scmp.eq.s32.totalorder %s157, 0
      %s160 = sadd.s32 %s159, 1
      %s161 = scalar_select %p158, %s159, %s160
      %p164 = pneg %p158
      %p165 = scmp.eq.s32.totalorder %s33, 3
      %p166 = por %p164, %p165
      %p167 = scmp.ne.s32.totalorder %s159, %s162
      %p168 = scmp.eq.s32.totalorder %s33, 0
      %p169 = por %p167, %p168
      %p170 = scmp.ne.s32.totalorder %s159, %s162
      %p171 = scmp.eq.s32.totalorder %s38, 3
      %p172 = por %p170, %p171
      %p173 = scmp.ne.s32.totalorder %s162, %s163
      %p174 = scmp.eq.s32.totalorder %s38, 0
      %p175 = por %p173, %p174
      %p176 = scmp.ne.s32.totalorder %s162, %s163
      %p177 = scmp.eq.s32.totalorder %s39, 3
      %p178 = por %p176, %p177
      %p180 = scmp.ne.s32.totalorder %s163, %s179
      %p181 = scmp.eq.s32.totalorder %s39, 0
      %p182 = por %p180, %p181
      %s183 = ssub.s32 %s41, %s48
      %p184 = scmp.eq.s32.totalorder %s183, 0
      %s186 = sadd.s32 %s185, 1
      %s187 = scalar_select %p184, %s185, %s186
      %p190 = pneg %p184
      %p191 = scmp.eq.s32.totalorder %s33, 3
      %p192 = por %p190, %p191
      %p193 = scmp.ne.s32.totalorder %s185, %s188
      %p194 = scmp.eq.s32.totalorder %s33, 0
      %p195 = por %p193, %p194
      %p196 = scmp.ne.s32.totalorder %s185, %s188
      %p197 = scmp.eq.s32.totalorder %s38, 3
      %p198 = por %p196, %p197
      %p199 = scmp.ne.s32.totalorder %s188, %s189
      %p200 = scmp.eq.s32.totalorder %s38, 0
      %p201 = por %p199, %p200
      %p202 = scmp.ne.s32.totalorder %s188, %s189
      %p203 = scmp.eq.s32.totalorder %s39, 3
      %p204 = por %p202, %p203
      %p206 = scmp.ne.s32.totalorder %s189, %s205
      %p207 = scmp.eq.s32.totalorder %s39, 0
      %p208 = por %p206, %p207
      %s209 = ssub.s32 %s41, %s48
      %p210 = scmp.eq.s32.totalorder %s209, 0
      %s212 = sadd.s32 %s211, 1
      %s213 = scalar_select %p210, %s211, %s212
      %p216 = pneg %p210
      %p217 = scmp.eq.s32.totalorder %s33, 3
      %p218 = por %p216, %p217
      %p219 = scmp.ne.s32.totalorder %s211, %s214
      %p220 = scmp.eq.s32.totalorder %s33, 0
      %p221 = por %p219, %p220
      %p222 = scmp.ne.s32.totalorder %s211, %s214
      %p223 = scmp.eq.s32.totalorder %s38, 3
      %p224 = por %p222, %p223
      %p225 = scmp.ne.s32.totalorder %s214, %s215
      %p226 = scmp.eq.s32.totalorder %s38, 0
      %p227 = por %p225, %p226
      %p228 = scmp.ne.s32.totalorder %s214, %s215
      %p229 = scmp.eq.s32.totalorder %s39, 3
      %p230 = por %p228, %p229
      %p232 = scmp.ne.s32.totalorder %s215, %s231
      %p233 = scmp.eq.s32.totalorder %s39, 0
      %p234 = por %p232, %p233
      %s235 = ssub.s32 %s41, %s48
      %p236 = scmp.eq.s32.totalorder %s235, 0
      %s238 = sadd.s32 %s237, 1
      %s239 = scalar_select %p236, %s237, %s238
      %p242 = pneg %p236
      %p243 = scmp.eq.s32.totalorder %s33, 3
      %p244 = por %p242, %p243
      %p245 = scmp.ne.s32.totalorder %s237, %s240
      %p246 = scmp.eq.s32.totalorder %s33, 0
      %p247 = por %p245, %p246
      %p248 = scmp.ne.s32.totalorder %s237, %s240
      %p249 = scmp.eq.s32.totalorder %s38, 3
      %p250 = por %p248, %p249
      %p251 = scmp.ne.s32.totalorder %s240, %s241
      %p252 = scmp.eq.s32.totalorder %s38, 0
      %p253 = por %p251, %p252
      %p254 = scmp.ne.s32.totalorder %s240, %s241
      %p255 = scmp.eq.s32.totalorder %s39, 3
      %p256 = por %p254, %p255
      %p258 = scmp.ne.s32.totalorder %s241, %s257
      %p259 = scmp.eq.s32.totalorder %s39, 0
      %p260 = por %p258, %p259
      %s261 = ssub.s32 %s41, %s48
      %p262 = scmp.eq.s32.totalorder %s261, 0
      %s264 = sadd.s32 %s263, 1
      %s265 = scalar_select %p262, %s263, %s264
      %p268 = pneg %p262
      %p269 = scmp.eq.s32.totalorder %s33, 3
      %p270 = por %p268, %p269
      %p271 = scmp.ne.s32.totalorder %s263, %s266
      %p272 = scmp.eq.s32.totalorder %s33, 0
      %p273 = por %p271, %p272
      %p274 = scmp.ne.s32.totalorder %s263, %s266
      %p275 = scmp.eq.s32.totalorder %s38, 3
      %p276 = por %p274, %p275
      %p277 = scmp.ne.s32.totalorder %s266, %s267
      %p278 = scmp.eq.s32.totalorder %s38, 0
      %p279 = por %p277, %p278
      %p280 = scmp.ne.s32.totalorder %s266, %s267
      %p281 = scmp.eq.s32.totalorder %s39, 3
      %p282 = por %p280, %p281
      %p284 = scmp.ne.s32.totalorder %s267, %s283
      %p285 = scmp.eq.s32.totalorder %s39, 0
      %p286 = por %p284, %p285
      %s287 = ssub.s32 %s41, %s48
      %p288 = scmp.eq.s32.totalorder %s287, 0
      %s290 = sadd.s32 %s289, 1
      %s291 = scalar_select %p288, %s289, %s290
      %p294 = pneg %p288
      %p295 = scmp.eq.s32.totalorder %s33, 3
      %p296 = por %p294, %p295
      %p297 = scmp.ne.s32.totalorder %s289, %s292
      %p298 = scmp.eq.s32.totalorder %s33, 0
      %p299 = por %p297, %p298
      %p300 = scmp.ne.s32.totalorder %s289, %s292
      %p301 = scmp.eq.s32.totalorder %s38, 3
      %p302 = por %p300, %p301
      %p303 = scmp.ne.s32.totalorder %s292, %s293
      %p304 = scmp.eq.s32.totalorder %s38, 0
      %p305 = por %p303, %p304
      %p306 = scmp.ne.s32.totalorder %s292, %s293
      %p307 = scmp.eq.s32.totalorder %s39, 3
      %p308 = por %p306, %p307
      %p310 = scmp.ne.s32.totalorder %s293, %s309
      %p311 = scmp.eq.s32.totalorder %s39, 0
      %p312 = por %p310, %p311
      %s313 = ssub.s32 %s41, %s48
      %p314 = scmp.eq.s32.totalorder %s313, 0
      %s316 = sadd.s32 %s315, 1
      %s317 = scalar_select %p314, %s315, %s316
      %p320 = pneg %p314
      %p321 = scmp.eq.s32.totalorder %s33, 3
      %p322 = por %p320, %p321
      %p323 = scmp.ne.s32.totalorder %s315, %s318
      %p324 = scmp.eq.s32.totalorder %s33, 0
      %p325 = por %p323, %p324
      %p326 = scmp.ne.s32.totalorder %s315, %s318
      %p327 = scmp.eq.s32.totalorder %s38, 3
      %p328 = por %p326, %p327
      %p329 = scmp.ne.s32.totalorder %s318, %s319
      %p330 = scmp.eq.s32.totalorder %s38, 0
      %p331 = por %p329, %p330
      %p332 = scmp.ne.s32.totalorder %s318, %s319
      %p333 = scmp.eq.s32.totalorder %s39, 3
      %p334 = por %p332, %p333
      %p336 = scmp.ne.s32.totalorder %s319, %s335
      %p337 = scmp.eq.s32.totalorder %s39, 0
      %p338 = por %p336, %p337
      %s339 = ssub.s32 %s41, %s48
      %p340 = scmp.eq.s32.totalorder %s339, 0
      %s342 = sadd.s32 %s341, 1
      %s343 = scalar_select %p340, %s341, %s342
      %p346 = pneg %p340
      %p347 = scmp.eq.s32.totalorder %s33, 3
      %p348 = por %p346, %p347
      %p349 = scmp.ne.s32.totalorder %s341, %s344
      %p350 = scmp.eq.s32.totalorder %s33, 0
      %p351 = por %p349, %p350
      %p352 = scmp.ne.s32.totalorder %s341, %s344
      %p353 = scmp.eq.s32.totalorder %s38, 3
      %p354 = por %p352, %p353
      %p355 = scmp.ne.s32.totalorder %s344, %s345
      %p356 = scmp.eq.s32.totalorder %s38, 0
      %p357 = por %p355, %p356
      %p358 = scmp.ne.s32.totalorder %s344, %s345
      %p359 = scmp.eq.s32.totalorder %s39, 3
      %p360 = por %p358, %p359
      %p362 = scmp.ne.s32.totalorder %s345, %s361
      %p363 = scmp.eq.s32.totalorder %s39, 0
      %p364 = por %p362, %p363
      %s365 = ssub.s32 %s41, %s48
      %p366 = scmp.eq.s32.totalorder %s365, 0
      %s368 = sadd.s32 %s367, 1
      %s369 = scalar_select %p366, %s367, %s368
      %p372 = pneg %p366
      %p373 = scmp.eq.s32.totalorder %s33, 3
      %p374 = por %p372, %p373
      %p375 = scmp.ne.s32.totalorder %s367, %s370
      %p376 = scmp.eq.s32.totalorder %s33, 0
      %p377 = por %p375, %p376
      %p378 = scmp.ne.s32.totalorder %s367, %s370
      %p379 = scmp.eq.s32.totalorder %s38, 3
      %p380 = por %p378, %p379
      %p381 = scmp.ne.s32.totalorder %s370, %s371
      %p382 = scmp.eq.s32.totalorder %s38, 0
      %p383 = por %p381, %p382
      %p384 = scmp.ne.s32.totalorder %s370, %s371
      %p385 = scmp.eq.s32.totalorder %s39, 3
      %p386 = por %p384, %p385
      %p388 = scmp.ne.s32.totalorder %s371, %s387
      %p389 = scmp.eq.s32.totalorder %s39, 0
      %p390 = por %p388, %p389
      %s392 = sadd.s32 %s391, 1
      %p395 = scmp.eq.s32.totalorder %s33, 3
      %p396 = scmp.ne.s32.totalorder %s391, %s393
      %p397 = scmp.eq.s32.totalorder %s33, 0
      %p398 = por %p396, %p397
      %p399 = scmp.ne.s32.totalorder %s391, %s393
      %p400 = scmp.eq.s32.totalorder %s38, 3
      %p401 = por %p399, %p400
      %p402 = scmp.ne.s32.totalorder %s393, %s394
      %p403 = scmp.eq.s32.totalorder %s38, 0
      %p404 = por %p402, %p403
      %p405 = scmp.ne.s32.totalorder %s393, %s394
      %p406 = scmp.eq.s32.totalorder %s39, 3
      %p407 = por %p405, %p406
      %p409 = scmp.ne.s32.totalorder %s394, %s408
      %p410 = scmp.eq.s32.totalorder %s39, 0
      %p411 = por %p409, %p410
      %s413 = sadd.s32 %s412, 1
      %p416 = scmp.eq.s32.totalorder %s33, 3
      %p417 = scmp.ne.s32.totalorder %s412, %s414
      %p418 = scmp.eq.s32.totalorder %s33, 0
      %p419 = por %p417, %p418
      %p420 = scmp.ne.s32.totalorder %s412, %s414
      %p421 = scmp.eq.s32.totalorder %s38, 3
      %p422 = por %p420, %p421
      %p423 = scmp.ne.s32.totalorder %s414, %s415
      %p424 = scmp.eq.s32.totalorder %s38, 0
      %p425 = por %p423, %p424
      %p426 = scmp.ne.s32.totalorder %s414, %s415
      %p427 = scmp.eq.s32.totalorder %s39, 3
      %p428 = por %p426, %p427
      %p430 = scmp.ne.s32.totalorder %s415, %s429
      %p431 = scmp.eq.s32.totalorder %s39, 0
      %p432 = por %p430, %p431
      %s433 = ssub.s32 %s40, %s52
      %p434 = scmp.eq.s32.totalorder %s433, 0
      %s436 = sadd.s32 %s435, 1
      %s437 = scalar_select %p434, %s435, %s436
      %p440 = pneg %p434
      %p441 = scmp.eq.s32.totalorder %s33, 3
      %p442 = por %p440, %p441
      %p443 = scmp.ne.s32.totalorder %s435, %s438
      %p444 = scmp.eq.s32.totalorder %s33, 0
      %p445 = por %p443, %p444
      %p446 = scmp.ne.s32.totalorder %s435, %s438
      %p447 = scmp.eq.s32.totalorder %s38, 3
      %p448 = por %p446, %p447
      %p449 = scmp.ne.s32.totalorder %s438, %s439
      %p450 = scmp.eq.s32.totalorder %s38, 0
      %p451 = por %p449, %p450
      %p452 = scmp.ne.s32.totalorder %s438, %s439
      %p453 = scmp.eq.s32.totalorder %s39, 3
      %p454 = por %p452, %p453
      %p456 = scmp.ne.s32.totalorder %s439, %s455
      %p457 = scmp.eq.s32.totalorder %s39, 0
      %p458 = por %p456, %p457
      %p459 = scmp.le.s32.totalorder 1, %s33
      %p460 = scmp.lt.s32.totalorder %s33, 5
      %p461 = pnand %p459, %p460
      %p462 = pneg %p461
      // Predicated region
      $region9: #{tpu_custom_call.1} parent=5 // pred_check
        _
      $region10: #{tpu_custom_call.1} parent=5 // pred_check_branch
        %464 = sbr.rel (%p461) target = $region12
      $region11: #{tpu_custom_call.1} parent=5 // pred_region
        %s465 = ssub.s32 %s33, 1
        // Predicated region
        $region13: #{tpu_custom_call.1} parent=11 // pred_check
          %p466 = pneg %p404
        $region14: #{tpu_custom_call.1} parent=11 // pred_check_branch
          %468 = sbr.rel (%p466) target = $region16
        $region15: #{tpu_custom_call.1} parent=11 // pred_region
          _
        $region16: #{tpu_custom_call.1} parent=11 // pred_fallthru
          _
        // Predicated region
        $region17: #{tpu_custom_call.1} parent=11 // pred_check
          %p469 = pneg %p425
        $region18: #{tpu_custom_call.1} parent=11 // pred_check_branch
          %471 = sbr.rel (%p469) target = $region20
        $region19: #{tpu_custom_call.1} parent=11 // pred_region
          _
        $region20: #{tpu_custom_call.1} parent=11 // pred_fallthru
          _
      $region12: #{tpu_custom_call.1} parent=5 // pred_fallthru
        _
      %p472 = scmp.lt.s32.totalorder %s33, 4
      // Predicated region
      $region21: #{tpu_custom_call.1} parent=5 // pred_check
        %p473 = pneg %p472
      $region22: #{tpu_custom_call.1} parent=5 // pred_check_branch
        %475 = sbr.rel (%p473) target = $region24
      $region23: #{tpu_custom_call.1} parent=5 // pred_region
        // Predicated region
        $region25: #{tpu_custom_call.1} parent=23 // pred_check
          %p476 = pneg %p65
        $region26: #{tpu_custom_call.1} parent=23 // pred_check_branch
          %478 = sbr.rel (%p476) target = $region28
        $region27: #{tpu_custom_call.1} parent=23 // pred_region
          %s479 = sand.u32 %s55, 1
          %s480 = scalar_lea.sflag [#allocation3], %s479
          %s481 = sand.u32 %s55, 1
          %s482 = smul.addr %s481, 8
          %s483 = scalar_lea.vmem [#allocation2], %s482
          %s485 = ssub.s32 128, 128
          %486 = vsyncadd %s480, %s485
          %s487 = smul.addr %s40, 128
          %s488 = scalar_lea.hbm %s0, %s487
          %s490 = sshll.u32 %s483, 4
          %s491 = int_to_ptr.vmem [resolvable:$true] %s490
          %493 = dma.hbm_to_vmem [thread:$0]  %s488, 128, %s491, %s480
        $region28: #{tpu_custom_call.1} parent=23 // pred_fallthru
          _
        // Predicated region
        $region29: #{tpu_custom_call.1} parent=23 // pred_check
          %p494 = pneg %p91
        $region30: #{tpu_custom_call.1} parent=23 // pred_check_branch
          %496 = sbr.rel (%p494) target = $region32
        $region31: #{tpu_custom_call.1} parent=23 // pred_region
          %p497 = scmp.lt.s32.totalorder %s41, 1
          %s498 = scalar_select %p497, %s41, 1
          %s499 = scalar_lea.vmem %s1, %s498
        $region32: #{tpu_custom_call.1} parent=23 // pred_fallthru
          _
        // Predicated region
        $region33: #{tpu_custom_call.1} parent=23 // pred_check
          %p500 = pneg %p117
        $region34: #{tpu_custom_call.1} parent=23 // pred_check_branch
          %502 = sbr.rel (%p500) target = $region36
        $region35: #{tpu_custom_call.1} parent=23 // pred_region
          %p503 = scmp.lt.s32.totalorder %s41, 1
          %s504 = scalar_select %p503, %s41, 1
          %s505 = scalar_lea.vmem %s2, %s504
        $region36: #{tpu_custom_call.1} parent=23 // pred_fallthru
          _
        // Predicated region
        $region37: #{tpu_custom_call.1} parent=23 // pred_check
          %p506 = pneg %p143
        $region38: #{tpu_custom_call.1} parent=23 // pred_check_branch
          %508 = sbr.rel (%p506) target = $region40
        $region39: #{tpu_custom_call.1} parent=23 // pred_region
          %p509 = scmp.lt.s32.totalorder %s41, 1
          %s510 = scalar_select %p509, %s41, 1
          %s511 = smul.addr %s510, 4
          %s512 = smul.addr %s511, 4
          %s513 = scalar_lea.vmem %s3, %s512
        $region40: #{tpu_custom_call.1} parent=23 // pred_fallthru
          _
        // Predicated region
        $region41: #{tpu_custom_call.1} parent=23 // pred_check
          %p514 = pneg %p169
        $region42: #{tpu_custom_call.1} parent=23 // pred_check_branch
          %516 = sbr.rel (%p514) target = $region44
        $region43: #{tpu_custom_call.1} parent=23 // pred_region
          %p517 = scmp.lt.s32.totalorder %s41, 1
          %s518 = scalar_select %p517, %s41, 1
          %s519 = scalar_lea.vmem %s4, %s518
        $region44: #{tpu_custom_call.1} parent=23 // pred_fallthru
          _
        // Predicated region
        $region45: #{tpu_custom_call.1} parent=23 // pred_check
          %p520 = pneg %p195
        $region46: #{tpu_custom_call.1} parent=23 // pred_check_branch
          %522 = sbr.rel (%p520) target = $region48
        $region47: #{tpu_custom_call.1} parent=23 // pred_region
          %p523 = scmp.lt.s32.totalorder %s41, 1
          %s524 = scalar_select %p523, %s41, 1
          %s525 = smul.addr %s524, 4
          %s526 = smul.addr %s525, 4
          %s527 = scalar_lea.vmem %s5, %s526
        $region48: #{tpu_custom_call.1} parent=23 // pred_fallthru
          _
        // Predicated region
        $region49: #{tpu_custom_call.1} parent=23 // pred_check
          %p528 = pneg %p221
        $region50: #{tpu_custom_call.1} parent=23 // pred_check_branch
          %530 = sbr.rel (%p528) target = $region52
        $region51: #{tpu_custom_call.1} parent=23 // pred_region
          %p531 = scmp.lt.s32.totalorder %s41, 1
          %s532 = scalar_select %p531, %s41, 1
          %s533 = scalar_lea.vmem %s6, %s532
        $region52: #{tpu_custom_call.1} parent=23 // pred_fallthru
          _
        // Predicated region
        $region53: #{tpu_custom_call.1} parent=23 // pred_check
          %p534 = pneg %p247
        $region54: #{tpu_custom_call.1} parent=23 // pred_check_branch
          %536 = sbr.rel (%p534) target = $region56
        $region55: #{tpu_custom_call.1} parent=23 // pred_region
          %s537 = sand.u32 %s33, 1
          %s538 = scalar_lea.sflag [#allocation6], %s537
          %s539 = sand.u32 %s237, 1
          %s540 = scalar_lea.vmem [#allocation5], %s539
          %s542 = ssub.s32 16, 16
          %543 = vsyncadd %s538, %s542
          %s544 = smul.addr %s41, 16
          %s545 = scalar_lea.hbm %s7, %s544
          %s547 = sshll.u32 %s540, 4
          %s548 = int_to_ptr.vmem [resolvable:$true] %s547
          %550 = dma.hbm_to_vmem [thread:$0]  %s545, 16, %s548, %s538
        $region56: #{tpu_custom_call.1} parent=23 // pred_fallthru
          _
        // Predicated region
        $region57: #{tpu_custom_call.1} parent=23 // pred_check
          %p551 = pneg %p273
        $region58: #{tpu_custom_call.1} parent=23 // pred_check_branch
          %553 = sbr.rel (%p551) target = $region60
        $region59: #{tpu_custom_call.1} parent=23 // pred_region
          %s554 = sand.u32 %s33, 1
          %s555 = scalar_lea.sflag [#allocation6], %s554
          %s556 = sand.u32 %s263, 1
          %s557 = scalar_lea.vmem [#allocation7], %s556
          %s559 = ssub.s32 16, 16
          %560 = vsyncadd %s555, %s559
          %s561 = smul.addr %s41, 16
          %s562 = scalar_lea.hbm %s8, %s561
          %s564 = sshll.u32 %s557, 4
          %s565 = int_to_ptr.vmem [resolvable:$true] %s564
          %567 = dma.hbm_to_vmem [thread:$0]  %s562, 16, %s565, %s555
        $region60: #{tpu_custom_call.1} parent=23 // pred_fallthru
          _
        // Predicated region
        $region61: #{tpu_custom_call.1} parent=23 // pred_check
          %p568 = pneg %p299
        $region62: #{tpu_custom_call.1} parent=23 // pred_check_branch
          %570 = sbr.rel (%p568) target = $region64
        $region63: #{tpu_custom_call.1} parent=23 // pred_region
          %p571 = scmp.lt.s32.totalorder %s41, 1
          %s572 = scalar_select %p571, %s41, 1
          %s573 = smul.addr %s572, 4
          %s574 = smul.addr %s573, 4
          %s575 = scalar_lea.vmem %s9, %s574
        $region64: #{tpu_custom_call.1} parent=23 // pred_fallthru
          _
        // Predicated region
        $region65: #{tpu_custom_call.1} parent=23 // pred_check
          %p576 = pneg %p325
        $region66: #{tpu_custom_call.1} parent=23 // pred_check_branch
          %578 = sbr.rel (%p576) target = $region68
        $region67: #{tpu_custom_call.1} parent=23 // pred_region
          %s579 = sand.u32 %s315, 1
          %s580 = scalar_lea.sflag [#allocation9], %s579
          %s581 = sand.u32 %s315, 1
          %s582 = scalar_lea.vmem [#allocation8], %s581
          %s584 = ssub.s32 16, 16
          %585 = vsyncadd %s580, %s584
          %s586 = smul.addr %s41, 16
          %s587 = scalar_lea.hbm %s10, %s586
          %s589 = sshll.u32 %s582, 4
          %s590 = int_to_ptr.vmem [resolvable:$true] %s589
          %592 = dma.hbm_to_vmem [thread:$0]  %s587, 16, %s590, %s580
        $region68: #{tpu_custom_call.1} parent=23 // pred_fallthru
          _
        // Predicated region
        $region69: #{tpu_custom_call.1} parent=23 // pred_check
          %p593 = pneg %p351
        $region70: #{tpu_custom_call.1} parent=23 // pred_check_branch
          %595 = sbr.rel (%p593) target = $region72
        $region71: #{tpu_custom_call.1} parent=23 // pred_region
          %p596 = scmp.lt.s32.totalorder %s41, 1
          %s597 = scalar_select %p596, %s41, 1
          %s598 = smul.addr %s597, 8
          %s599 = smul.addr %s598, 4
          %s600 = scalar_lea.vmem %s11, %s599
        $region72: #{tpu_custom_call.1} parent=23 // pred_fallthru
          _
        // Predicated region
        $region73: #{tpu_custom_call.1} parent=23 // pred_check
          %p601 = pneg %p377
        $region74: #{tpu_custom_call.1} parent=23 // pred_check_branch
          %603 = sbr.rel (%p601) target = $region76
        $region75: #{tpu_custom_call.1} parent=23 // pred_region
          %p604 = scmp.lt.s32.totalorder %s41, 1
          %s605 = scalar_select %p604, %s41, 1
          %s606 = scalar_lea.vmem %s12, %s605
        $region76: #{tpu_custom_call.1} parent=23 // pred_fallthru
          _
      $region24: #{tpu_custom_call.1} parent=5 // pred_fallthru
        _
      %p607 = scmp.le.s32.totalorder 1, %s33
      %p608 = scmp.lt.s32.totalorder %s33, 5
      %p609 = pnand %p607, %p608
      %p610 = pneg %p609
      // Predicated region
      $region77: #{tpu_custom_call.1} parent=5 // pred_check
        _
      $region78: #{tpu_custom_call.1} parent=5 // pred_check_branch
        %612 = sbr.rel (%p609) target = $region80
      $region79: #{tpu_custom_call.1} parent=5 // pred_region
        %s613 = ssub.s32 %s33, 1
        %s614 = sand.u32 %s58, 1
        %s615 = scalar_lea.sflag [#allocation3], %s614
        %s616 = sand.u32 %s58, 1
        %s617 = smul.addr %s616, 8
        %s618 = scalar_lea.vmem [#allocation2], %s617
        // Predicated region
        $region81: #{tpu_custom_call.1} parent=79 // pred_check
          %p619 = pneg %p71
        $region82: #{tpu_custom_call.1} parent=79 // pred_check_branch
          %621 = sbr.rel (%p619) target = $region84
        $region83: #{tpu_custom_call.1} parent=79 // pred_region
          %622 = dma.done %s615, 128
        $region84: #{tpu_custom_call.1} parent=79 // pred_fallthru
          _
        %s623 = sand.u32 %s38, 1
        %s624 = scalar_lea.sflag [#allocation6], %s623
        %s625 = sand.u32 %s240, 1
        %s626 = scalar_lea.vmem [#allocation5], %s625
        // Predicated region
        $region85: #{tpu_custom_call.1} parent=79 // pred_check
          %p627 = pneg %p253
        $region86: #{tpu_custom_call.1} parent=79 // pred_check_branch
          %629 = sbr.rel (%p627) target = $region88
        $region87: #{tpu_custom_call.1} parent=79 // pred_region
          %630 = dma.done %s624, 16
        $region88: #{tpu_custom_call.1} parent=79 // pred_fallthru
          _
        %s631 = sand.u32 %s38, 1
        %s632 = scalar_lea.sflag [#allocation6], %s631
        %s633 = sand.u32 %s266, 1
        %s634 = scalar_lea.vmem [#allocation7], %s633
        // Predicated region
        $region89: #{tpu_custom_call.1} parent=79 // pred_check
          %p635 = pneg %p279
        $region90: #{tpu_custom_call.1} parent=79 // pred_check_branch
          %637 = sbr.rel (%p635) target = $region92
        $region91: #{tpu_custom_call.1} parent=79 // pred_region
          %638 = dma.done %s632, 16
        $region92: #{tpu_custom_call.1} parent=79 // pred_fallthru
          _
        %s639 = sand.u32 %s318, 1
        %s640 = scalar_lea.sflag [#allocation9], %s639
        %s641 = sand.u32 %s318, 1
        %s642 = scalar_lea.vmem [#allocation8], %s641
        // Predicated region
        $region93: #{tpu_custom_call.1} parent=79 // pred_check
          %p643 = pneg %p331
        $region94: #{tpu_custom_call.1} parent=79 // pred_check_branch
          %645 = sbr.rel (%p643) target = $region96
        $region95: #{tpu_custom_call.1} parent=79 // pred_region
          %646 = dma.done %s640, 16
        $region96: #{tpu_custom_call.1} parent=79 // pred_fallthru
          _
        %s647 = sand.u32 %s58, 1
        %s648 = scalar_lea.sflag [#allocation3], %s647
        %s649 = sand.u32 %s58, 1
        %s650 = smul.addr %s649, 8
        %s651 = scalar_lea.vmem [#allocation2], %s650
        %p652 = pneg %p71
        %p653 = pneg %p68
        %p654 = scmp.lt.s32.totalorder %s43, 1
        %s655 = scalar_select %p654, %s43, 1
        %s656 = scalar_lea.vmem %s1, %s655
        %p657 = pneg %p97
        %p658 = pneg %p94
        %p659 = scmp.lt.s32.totalorder %s43, 1
        %s660 = scalar_select %p659, %s43, 1
        %s661 = scalar_lea.vmem %s2, %s660
        %p662 = pneg %p123
        %p663 = pneg %p120
        %p664 = scmp.lt.s32.totalorder %s43, 1
        %s665 = scalar_select %p664, %s43, 1
        %s666 = smul.addr %s665, 4
        %s667 = smul.addr %s666, 4
        %s668 = scalar_lea.vmem %s3, %s667
        %p669 = pneg %p149
        %p670 = pneg %p146
        %p671 = scmp.lt.s32.totalorder %s43, 1
        %s672 = scalar_select %p671, %s43, 1
        %s673 = scalar_lea.vmem %s4, %s672
        %p674 = pneg %p175
        %p675 = pneg %p172
        %p676 = scmp.lt.s32.totalorder %s43, 1
        %s677 = scalar_select %p676, %s43, 1
        %s678 = smul.addr %s677, 4
        %s679 = smul.addr %s678, 4
        %s680 = scalar_lea.vmem %s5, %s679
        %p681 = pneg %p201
        %p682 = pneg %p198
        %p683 = scmp.lt.s32.totalorder %s43, 1
        %s684 = scalar_select %p683, %s43, 1
        %s685 = scalar_lea.vmem %s6, %s684
        %p686 = pneg %p227
        %p687 = pneg %p224
        %s688 = sand.u32 %s38, 1
        %s689 = scalar_lea.sflag [#allocation6], %s688
        %s690 = sand.u32 %s240, 1
        %s691 = scalar_lea.vmem [#allocation5], %s690
        %p692 = pneg %p253
        %p693 = pneg %p250
        %s694 = sand.u32 %s38, 1
        %s695 = scalar_lea.sflag [#allocation6], %s694
        %s696 = sand.u32 %s266, 1
        %s697 = scalar_lea.vmem [#allocation7], %s696
        %p698 = pneg %p279
        %p699 = pneg %p276
        %p700 = scmp.lt.s32.totalorder %s43, 1
        %s701 = scalar_select %p700, %s43, 1
        %s702 = smul.addr %s701, 4
        %s703 = smul.addr %s702, 4
        %s704 = scalar_lea.vmem %s9, %s703
        %p705 = pneg %p305
        %p706 = pneg %p302
        %s707 = sand.u32 %s318, 1
        %s708 = scalar_lea.sflag [#allocation9], %s707
        %s709 = sand.u32 %s318, 1
        %s710 = scalar_lea.vmem [#allocation8], %s709
        %p711 = pneg %p331
        %p712 = pneg %p328
        %p713 = scmp.lt.s32.totalorder %s43, 1
        %s714 = scalar_select %p713, %s43, 1
        %s715 = smul.addr %s714, 8
        %s716 = smul.addr %s715, 4
        %s717 = scalar_lea.vmem %s11, %s716
        %p718 = pneg %p357
        %p719 = pneg %p354
        %p720 = scmp.lt.s32.totalorder %s43, 1
        %s721 = scalar_select %p720, %s43, 1
        %s722 = scalar_lea.vmem %s12, %s721
        %p723 = pneg %p383
        %p724 = pneg %p380
        %p725 = pneg %p404
        %p726 = pneg %p401
        %p727 = pneg %p425
        %p728 = pneg %p422
        %p729 = pneg %p451
        %p730 = pneg %p448
        %s731 = sand.u32 %s438, 1
        %s732 = scalar_lea.sflag [#allocation4], %s731
        %s733 = sand.u32 %s438, 1
        %s734 = smul.addr %s733, 8
        %s735 = scalar_lea.vmem [#allocation10], %s734
        %p736 = scmp.lt.s32.totalorder %s43, 1
        %s737 = scalar_select %p736, %s43, 1
        %s738 = scalar_lea.vmem %s1, %s737
        %p739 = scmp.lt.s32.totalorder %s43, 1
        %s740 = scalar_select %p739, %s43, 1
        %s741 = scalar_lea.vmem %s2, %s740
        %p742 = scmp.lt.s32.totalorder %s43, 1
        %s743 = scalar_select %p742, %s43, 1
        %s744 = smul.addr %s743, 4
        %s745 = smul.addr %s744, 4
        %s746 = scalar_lea.vmem %s3, %s745
        %p747 = scmp.lt.s32.totalorder %s43, 1
        %s748 = scalar_select %p747, %s43, 1
        %s749 = scalar_lea.vmem %s4, %s748
        %p750 = scmp.lt.s32.totalorder %s43, 1
        %s751 = scalar_select %p750, %s43, 1
        %s752 = smul.addr %s751, 4
        %s753 = smul.addr %s752, 4
        %s754 = scalar_lea.vmem %s5, %s753
        %p755 = scmp.lt.s32.totalorder %s43, 1
        %s756 = scalar_select %p755, %s43, 1
        %s757 = scalar_lea.vmem %s6, %s756
        %p758 = scmp.lt.s32.totalorder %s43, 1
        %s759 = scalar_select %p758, %s43, 1
        %s760 = smul.addr %s759, 4
        %s761 = smul.addr %s760, 4
        %s762 = scalar_lea.vmem %s9, %s761
        %p763 = scmp.lt.s32.totalorder %s43, 1
        %s764 = scalar_select %p763, %s43, 1
        %s765 = smul.addr %s764, 8
        %s766 = smul.addr %s765, 4
        %s767 = scalar_lea.vmem %s11, %s766
        %p768 = scmp.lt.s32.totalorder %s43, 1
        %s769 = scalar_select %p768, %s43, 1
        %s770 = scalar_lea.vmem %s12, %s769
        %p772 = scmp.eq.s32.totalorder %s43, 0
        // Predicated region
        $region97: #{tpu_custom_call.1} parent=79 // pred_check
          %p773 = pneg %p772
        $region98: #{tpu_custom_call.1} parent=79 // pred_check_branch
          %775 = sbr.rel (%p773) target = $region100
        $region99: #{tpu_custom_call.1} parent=79 // pred_region
          %v776 = vld [vmem:[%s618] sm:$0xff]
          %vm777 = vcmask 261120
          %778 = vst.msk [vmem:[%s735] sm:$0xff] %vm777, %v776
        $region100: #{tpu_custom_call.1} parent=79 // pred_fallthru
          _
        %v779 = vld [vmem:[%s735] sm:$0xff]
        %v780 = vld [vmem:[%s738] sm:$0x1]
        %v781 = vld [vmem:[%s741] sm:$0x1]
        %vm782 = vcmask 261120
        %v783 = vsel %vm782, %v779, 0.0
        %784 = vadd.xlane.f32.xlu0 %v783
        %v785 = vpop.xlane.xlu0 %784
        %v786 = vrcp.pop 32.0
        %v787 = vmul.f32 %v785, %v786
        %v788 = vsub.f32 %v779, %v787
        %v789 = vmul.f32 %v788, %v788
        %v790 = vsel %vm782, %v789, 0.0
        %791 = vadd.xlane.f32.xlu0 %v790
        %v792 = vpop.xlane.xlu0 %791
        %v793 = vmul.f32 %v792, %v786
        %v794 = vadd.f32 %v793, 1e-05
        %v795 = vrsqrt.pop %v794
        %v796 = vmul.f32 %v788, %v795
        %v798 = vlaneseq
        %v799 = vshrl.u32 %v798, 7
        %v800 = vsub.s32 0, %v799
        %v801 = vrot.slane %v780, %v800
        %v803 = vmul.f32 %v796, %v801
        %v805 = vlaneseq
        %v806 = vshrl.u32 %v805, 7
        %v807 = vsub.s32 0, %v806
        %v808 = vrot.slane %v781, %v807
        %v810 = vadd.f32 %v803, %v808
        %v811 = vpack.c.bf16 %v810, %v810
        %v812 = vld [vmem:[%s746] sm:$0xf]
        %v813 = vld [vmem:[%s746 + $0x4] sm:$0xf]
        %v814 = vld [vmem:[%s746 + $0x8] sm:$0xf]
        %v815 = vld [vmem:[%s746 + $0xc] sm:$0xf]
        %v816 = vld [vmem:[%s749] sm:$0x1]
        %v818 = vlaneseq
        %v819 = vshrl.u32 %v818, 7
        %v820 = vsub.s32 0, %v819
        %v821 = vrot.slane %v816, %v820
        %v827 = vunpack.c.l.b16 %v812
        %v828 = vunpack.c.l.b16 %v813
        %v829 = vunpack.c.l.b16 %v814
        %v830 = vunpack.c.l.b16 %v815
        %v831 = vpack.c.b16 %v828, %v827
        %v832 = vpack.c.b16 %v830, %v829
        %v836 = vsel %vm782, %v811, 0
        %838 = vmatprep.subr.bf16.mxu0 0
        %839 = vmatpush1.bf16.msra.mxu0 %v831
        %840 = vmatprep.subr.bf16.mxu0 0
        %841 = vmatpush1.bf16.msra.mxu0 %v832
        %842 = vmatprep.subr.bf16.mxu0 0
        %843 = vmatpush1.bf16.msra.mxu0 0
        %844 = vmatprep.subr.bf16.mxu0 0
        %845 = vmatpush1.bf16.msra.mxu0 0
        %846 = vmatprep.subr.bf16.mxu0 0
        %847 = vmatpush1.bf16.msra.mxu0 0
        %848 = vmatprep.subr.bf16.mxu0 0
        %849 = vmatpush1.bf16.msra.mxu0 0
        %850 = vmatprep.subr.bf16.mxu0 0
        %851 = vmatpush1.bf16.msra.mxu0 0
        %852 = vmatprep.subr.bf16.mxu0 0
        %853 = vmatpush1.bf16.msra.mxu0 0
        %854 = vmatprep.subr.bf16.mxu0 0
        %855 = vmatpush1.bf16.msra.mxu0 0
        %856 = vmatprep.subr.bf16.mxu0 0
        %857 = vmatpush1.bf16.msra.mxu0 0
        %858 = vmatprep.subr.bf16.mxu0 0
        %859 = vmatpush1.bf16.msra.mxu0 0
        %860 = vmatprep.subr.bf16.mxu0 0
        %861 = vmatpush1.bf16.msra.mxu0 0
        %862 = vmatprep.subr.bf16.mxu0 0
        %863 = vmatpush1.bf16.msra.mxu0 0
        %864 = vmatprep.subr.bf16.mxu0 0
        %865 = vmatpush1.bf16.msra.mxu0 0
        %866 = vmatprep.subr.bf16.mxu0 0
        %867 = vmatpush1.bf16.msra.mxu0 0
        %868 = vmatprep.subr.bf16.mxu0 0
        %869 = vmatpush1.bf16.msra.mxu0 0
        %870 = vmatprep.mubr.bf16.mxu0 0
        %871 = vmatmul.mubr.bf16.gmra.mrb[0].mxu0 %v836
        %v872 = vpop.f32.mrb[0].mxu0
        %v873 = vadd.f32 %v821, %v872
        %v874 = vpop.f32.mrb[0].mxu0
        %v875 = vpop.f32.mrb[0].mxu0
        %v876 = vpop.f32.mrb[0].mxu0
        %877 = vdwg.mxu0
        %v878 = vlaneseq
        %v879 = vshrl.u32 %v878, 7
        %v880 = vlaneseq
        %v881 = vand.u32 %v880, 127
        %vm882 = vcmp.lt.s32.totalorder %v879, %v881
        %v883 = vpack.c.bf16 %v873, %v873
        %885 = vrot.lane.b32.xlu0 %v883, 96
        %v886 = vpop.permute.xlu0 %885
        %vm887 = vcmask 130048
        %v889 = vsel %vm887, %v883, 0
        %v892 = vsel %vm887, %v886, 0
        %894 = vmatprep.subr.bf16.mxu0 0
        %895 = vmatpush1.bf16.xpose.msra.mxu0 %v892
        %896 = vmatprep.subr.bf16.mxu0 0
        %897 = vmatpush1.bf16.xpose.msra.mxu0 0
        %898 = vmatprep.subr.bf16.mxu0 0
        %899 = vmatpush1.bf16.xpose.msra.mxu0 0
        %900 = vmatprep.subr.bf16.mxu0 0
        %901 = vmatpush1.bf16.xpose.msra.mxu0 0
        %902 = vmatprep.subr.bf16.mxu0 0
        %903 = vmatpush1.bf16.xpose.msra.mxu0 0
        %904 = vmatprep.subr.bf16.mxu0 0
        %905 = vmatpush1.bf16.xpose.msra.mxu0 0
        %906 = vmatprep.subr.bf16.mxu0 0
        %907 = vmatpush1.bf16.xpose.msra.mxu0 0
        %908 = vmatprep.subr.bf16.mxu0 0
        %909 = vmatpush1.bf16.xpose.msra.mxu0 0
        %910 = vmatprep.subr.bf16.mxu0 0
        %911 = vmatpush1.bf16.xpose.msra.mxu0 0
        %912 = vmatprep.subr.bf16.mxu0 0
        %913 = vmatpush1.bf16.xpose.msra.mxu0 0
        %914 = vmatprep.subr.bf16.mxu0 0
        %915 = vmatpush1.bf16.xpose.msra.mxu0 0
        %916 = vmatprep.subr.bf16.mxu0 0
        %917 = vmatpush1.bf16.xpose.msra.mxu0 0
        %918 = vmatprep.subr.bf16.mxu0 0
        %919 = vmatpush1.bf16.xpose.msra.mxu0 0
        %920 = vmatprep.subr.bf16.mxu0 0
        %921 = vmatpush1.bf16.xpose.msra.mxu0 0
        %922 = vmatprep.subr.bf16.mxu0 0
        %923 = vmatpush1.bf16.xpose.msra.mxu0 0
        %924 = vmatprep.subr.bf16.mxu0 0
        %925 = vmatpush1.bf16.xpose.msra.mxu0 0
        %926 = vmatprep.mubr.bf16.mxu0 0
        %927 = vmatmul.mubr.bf16.gmra.mrb[0].mxu0 %v889
        %v928 = vpop.f32.mrb[0].mxu0
        %v929 = vadd.f32 0.0, %v928
        %v930 = vpop.f32.mrb[0].mxu0
        %v931 = vpop.f32.mrb[0].mxu0
        %v932 = vpop.f32.mrb[0].mxu0
        %933 = vdwg.mxu0
        %v934 = vmul.f32 %v929, 0.25
        %v935 = vsel %vm882, 1e-10, %v934
        %vm936 = vcmask 64512
        %v937 = vsel %vm936, %v935, -inf
        %938 = vmax.xlane.f32.xlu0 %v937
        %v939 = vpop.xlane.xlu0 %938
        %v940 = vsub.f32 %v935, %v939
        %v941 = vmul.f32 %v940, 1.442695
        %v942 = vpow.pop %v941
        %v943 = vsel %vm936, %v942, 0.0
        %944 = vadd.xlane.f32.xlu0 %v943
        %v945 = vpop.xlane.xlu0 %944
        %v946 = vrcp.pop %v945
        %v947 = vmul.f32 %v942, %v946
        %v948 = vpack.c.bf16 %v947, %v947
        %949 = vrot.lane.b32.xlu0 %v883, 64
        %v950 = vpop.permute.xlu0 %949
        %v952 = vsel %vm936, %v948, 0
        %vm954 = vcmask 1043456
        %v956 = vsel %vm954, %v950, 0
        %958 = vmatprep.subr.bf16.mxu0 0
        %959 = vmatpush1.bf16.msra.mxu0 %v956
        %960 = vmatprep.subr.bf16.mxu0 0
        %961 = vmatpush1.bf16.msra.mxu0 0
        %962 = vmatprep.subr.bf16.mxu0 0
        %963 = vmatpush1.bf16.msra.mxu0 0
        %964 = vmatprep.subr.bf16.mxu0 0
        %965 = vmatpush1.bf16.msra.mxu0 0
        %966 = vmatprep.subr.bf16.mxu0 0
        %967 = vmatpush1.bf16.msra.mxu0 0
        %968 = vmatprep.subr.bf16.mxu0 0
        %969 = vmatpush1.bf16.msra.mxu0 0
        %970 = vmatprep.subr.bf16.mxu0 0
        %971 = vmatpush1.bf16.msra.mxu0 0
        %972 = vmatprep.subr.bf16.mxu0 0
        %973 = vmatpush1.bf16.msra.mxu0 0
        %974 = vmatprep.subr.bf16.mxu0 0
        %975 = vmatpush1.bf16.msra.mxu0 0
        %976 = vmatprep.subr.bf16.mxu0 0
        %977 = vmatpush1.bf16.msra.mxu0 0
        %978 = vmatprep.subr.bf16.mxu0 0
        %979 = vmatpush1.bf16.msra.mxu0 0
        %980 = vmatprep.subr.bf16.mxu0 0
        %981 = vmatpush1.bf16.msra.mxu0 0
        %982 = vmatprep.subr.bf16.mxu0 0
        %983 = vmatpush1.bf16.msra.mxu0 0
        %984 = vmatprep.subr.bf16.mxu0 0
        %985 = vmatpush1.bf16.msra.mxu0 0
        %986 = vmatprep.subr.bf16.mxu0 0
        %987 = vmatpush1.bf16.msra.mxu0 0
        %988 = vmatprep.subr.bf16.mxu0 0
        %989 = vmatpush1.bf16.msra.mxu0 0
        %990 = vmatprep.mubr.bf16.mxu0 0
        %991 = vmatmul.mubr.bf16.gmra.mrb[0].mxu0 %v952
        %v992 = vpop.f32.mrb[0].mxu0
        %v993 = vadd.f32 0.0, %v992
        %v994 = vpop.f32.mrb[0].mxu0
        %v995 = vpop.f32.mrb[0].mxu0
        %v996 = vpop.f32.mrb[0].mxu0
        %997 = vdwg.mxu0
        %v998 = vpack.c.bf16 %v993, %v993
        %v999 = vld [vmem:[%s754] sm:$0xf]
        %v1000 = vld [vmem:[%s754 + $0x4] sm:$0xf]
        %1001 = vrot.lane.b32.xlu0 %v883, 112
        %v1002 = vpop.permute.xlu0 %1001
        %1003 = vrot.lane.b32.xlu0 %v883, 80
        %v1004 = vpop.permute.xlu0 %1003
        %v1006 = vsel %vm887, %v1002, 0
        %v1009 = vsel %vm887, %v1004, 0
        %1011 = vmatprep.subr.bf16.mxu0 0
        %1012 = vmatpush1.bf16.xpose.msra.mxu0 %v1009
        %1013 = vmatprep.subr.bf16.mxu0 0
        %1014 = vmatpush1.bf16.xpose.msra.mxu0 0
        %1015 = vmatprep.subr.bf16.mxu0 0
        %1016 = vmatpush1.bf16.xpose.msra.mxu0 0
        %1017 = vmatprep.subr.bf16.mxu0 0
        %1018 = vmatpush1.bf16.xpose.msra.mxu0 0
        %1019 = vmatprep.subr.bf16.mxu0 0
        %1020 = vmatpush1.bf16.xpose.msra.mxu0 0
        %1021 = vmatprep.subr.bf16.mxu0 0
        %1022 = vmatpush1.bf16.xpose.msra.mxu0 0
        %1023 = vmatprep.subr.bf16.mxu0 0
        %1024 = vmatpush1.bf16.xpose.msra.mxu0 0
        %1025 = vmatprep.subr.bf16.mxu0 0
        %1026 = vmatpush1.bf16.xpose.msra.mxu0 0
        %1027 = vmatprep.subr.bf16.mxu0 0
        %1028 = vmatpush1.bf16.xpose.msra.mxu0 0
        %1029 = vmatprep.subr.bf16.mxu0 0
        %1030 = vmatpush1.bf16.xpose.msra.mxu0 0
        %1031 = vmatprep.subr.bf16.mxu0 0
        %1032 = vmatpush1.bf16.xpose.msra.mxu0 0
        %1033 = vmatprep.subr.bf16.mxu0 0
        %1034 = vmatpush1.bf16.xpose.msra.mxu0 0
        %1035 = vmatprep.subr.bf16.mxu0 0
        %1036 = vmatpush1.bf16.xpose.msra.mxu0 0
        %1037 = vmatprep.subr.bf16.mxu0 0
        %1038 = vmatpush1.bf16.xpose.msra.mxu0 0
        %1039 = vmatprep.subr.bf16.mxu0 0
        %1040 = vmatpush1.bf16.xpose.msra.mxu0 0
        %1041 = vmatprep.subr.bf16.mxu0 0
        %1042 = vmatpush1.bf16.xpose.msra.mxu0 0
        %1043 = vmatprep.mubr.bf16.mxu0 0
        %1044 = vmatmul.mubr.bf16.gmra.mrb[0].mxu0 %v1006
        %v1045 = vpop.f32.mrb[0].mxu0
        %v1046 = vadd.f32 0.0, %v1045
        %v1047 = vpop.f32.mrb[0].mxu0
        %v1048 = vpop.f32.mrb[0].mxu0
        %v1049 = vpop.f32.mrb[0].mxu0
        %1050 = vdwg.mxu0
        %v1051 = vmul.f32 %v1046, 0.25
        %v1052 = vsel %vm882, 1e-10, %v1051
        %v1053 = vsel %vm936, %v1052, -inf
        %1054 = vmax.xlane.f32.xlu0 %v1053
        %v1055 = vpop.xlane.xlu0 %1054
        %v1056 = vsub.f32 %v1052, %v1055
        %v1057 = vmul.f32 %v1056, 1.442695
        %v1058 = vpow.pop %v1057
        %v1059 = vsel %vm936, %v1058, 0.0
        %1060 = vadd.xlane.f32.xlu0 %v1059
        %v1061 = vpop.xlane.xlu0 %1060
        %v1062 = vrcp.pop %v1061
        %v1063 = vmul.f32 %v1058, %v1062
        %v1064 = vpack.c.bf16 %v1063, %v1063
        %1065 = vrot.lane.b32.xlu0 %v883, 48
        %v1066 = vpop.permute.xlu0 %1065
        %v1068 = vsel %vm936, %v1064, 0
        %v1071 = vsel %vm954, %v1066, 0
        %1073 = vmatprep.subr.bf16.mxu0 0
        %1074 = vmatpush1.bf16.msra.mxu0 %v1071
        %1075 = vmatprep.subr.bf16.mxu0 0
        %1076 = vmatpush1.bf16.msra.mxu0 0
        %1077 = vmatprep.subr.bf16.mxu0 0
        %1078 = vmatpush1.bf16.msra.mxu0 0
        %1079 = vmatprep.subr.bf16.mxu0 0
        %1080 = vmatpush1.bf16.msra.mxu0 0
        %1081 = vmatprep.subr.bf16.mxu0 0
        %1082 = vmatpush1.bf16.msra.mxu0 0
        %1083 = vmatprep.subr.bf16.mxu0 0
        %1084 = vmatpush1.bf16.msra.mxu0 0
        %1085 = vmatprep.subr.bf16.mxu0 0
        %1086 = vmatpush1.bf16.msra.mxu0 0
        %1087 = vmatprep.subr.bf16.mxu0 0
        %1088 = vmatpush1.bf16.msra.mxu0 0
        %1089 = vmatprep.subr.bf16.mxu0 0
        %1090 = vmatpush1.bf16.msra.mxu0 0
        %1091 = vmatprep.subr.bf16.mxu0 0
        %1092 = vmatpush1.bf16.msra.mxu0 0
        %1093 = vmatprep.subr.bf16.mxu0 0
        %1094 = vmatpush1.bf16.msra.mxu0 0
        %1095 = vmatprep.subr.bf16.mxu0 0
        %1096 = vmatpush1.bf16.msra.mxu0 0
        %1097 = vmatprep.subr.bf16.mxu0 0
        %1098 = vmatpush1.bf16.msra.mxu0 0
        %1099 = vmatprep.subr.bf16.mxu0 0
        %1100 = vmatpush1.bf16.msra.mxu0 0
        %1101 = vmatprep.subr.bf16.mxu0 0
        %1102 = vmatpush1.bf16.msra.mxu0 0
        %1103 = vmatprep.subr.bf16.mxu0 0
        %1104 = vmatpush1.bf16.msra.mxu0 0
        %1105 = vmatprep.mubr.bf16.mxu0 0
        %1106 = vmatmul.mubr.bf16.gmra.mrb[0].mxu0 %v1068
        %v1107 = vpop.f32.mrb[0].mxu0
        %v1108 = vadd.f32 0.0, %v1107
        %v1109 = vpop.f32.mrb[0].mxu0
        %v1110 = vpop.f32.mrb[0].mxu0
        %v1111 = vpop.f32.mrb[0].mxu0
        %1112 = vdwg.mxu0
        %v1113 = vpack.c.bf16 %v1108, %v1108
        %s1114 = scalar_lea.vmem %s754, 8
        %v1115 = vld [vmem:[%s1114] sm:$0xf]
        %v1116 = vld [vmem:[%s1114 + $0x4] sm:$0xf]
        %v1119 = vunpack.c.l.b16 %v1115
        %v1120 = vunpack.c.l.b16 %v1116
        %v1121 = vpack.c.b16 %v1120, %v1119
        %v1124 = vsel %vm887, %v1113, 0
        %1126 = vmatprep.subr.bf16.mxu0 0
        %1127 = vmatpush1.bf16.msra.mxu0 %v1121
        %1128 = vmatprep.subr.bf16.mxu0 0
        %1129 = vmatpush1.bf16.msra.mxu0 0
        %1130 = vmatprep.subr.bf16.mxu0 0
        %1131 = vmatpush1.bf16.msra.mxu0 0
        %1132 = vmatprep.subr.bf16.mxu0 0
        %1133 = vmatpush1.bf16.msra.mxu0 0
        %1134 = vmatprep.subr.bf16.mxu0 0
        %1135 = vmatpush1.bf16.msra.mxu0 0
        %1136 = vmatprep.subr.bf16.mxu0 0
        %1137 = vmatpush1.bf16.msra.mxu0 0
        %1138 = vmatprep.subr.bf16.mxu0 0
        %1139 = vmatpush1.bf16.msra.mxu0 0
        %1140 = vmatprep.subr.bf16.mxu0 0
        %1141 = vmatpush1.bf16.msra.mxu0 0
        %1142 = vmatprep.subr.bf16.mxu0 0
        %1143 = vmatpush1.bf16.msra.mxu0 0
        %1144 = vmatprep.subr.bf16.mxu0 0
        %1145 = vmatpush1.bf16.msra.mxu0 0
        %1146 = vmatprep.subr.bf16.mxu0 0
        %1147 = vmatpush1.bf16.msra.mxu0 0
        %1148 = vmatprep.subr.bf16.mxu0 0
        %1149 = vmatpush1.bf16.msra.mxu0 0
        %1150 = vmatprep.subr.bf16.mxu0 0
        %1151 = vmatpush1.bf16.msra.mxu0 0
        %1152 = vmatprep.subr.bf16.mxu0 0
        %1153 = vmatpush1.bf16.msra.mxu0 0
        %1154 = vmatprep.subr.bf16.mxu0 0
        %1155 = vmatpush1.bf16.msra.mxu0 0
        %1156 = vmatprep.subr.bf16.mxu0 0
        %1157 = vmatpush1.bf16.msra.mxu0 0
        %1158 = vmatprep.mubr.bf16.mxu0 0
        %1159 = vmatmul.mubr.bf16.gmra.mrb[0].mxu0 %v1124
        %v1160 = vpop.f32.mrb[0].mxu0
        %v1161 = vadd.f32 0.0, %v1160
        %v1162 = vpop.f32.mrb[0].mxu0
        %v1163 = vpop.f32.mrb[0].mxu0
        %v1164 = vpop.f32.mrb[0].mxu0
        %1165 = vdwg.mxu0
        %v1168 = vunpack.c.l.b16 %v999
        %v1169 = vunpack.c.l.b16 %v1000
        %v1170 = vpack.c.b16 %v1169, %v1168
        %v1173 = vsel %vm887, %v998, 0
        %1175 = vmatprep.subr.bf16.mxu0 0
        %1176 = vmatpush1.bf16.msra.mxu0 %v1170
        %1177 = vmatprep.subr.bf16.mxu0 0
        %1178 = vmatpush1.bf16.msra.mxu0 0
        %1179 = vmatprep.subr.bf16.mxu0 0
        %1180 = vmatpush1.bf16.msra.mxu0 0
        %1181 = vmatprep.subr.bf16.mxu0 0
        %1182 = vmatpush1.bf16.msra.mxu0 0
        %1183 = vmatprep.subr.bf16.mxu0 0
        %1184 = vmatpush1.bf16.msra.mxu0 0
        %1185 = vmatprep.subr.bf16.mxu0 0
        %1186 = vmatpush1.bf16.msra.mxu0 0
        %1187 = vmatprep.subr.bf16.mxu0 0
        %1188 = vmatpush1.bf16.msra.mxu0 0
        %1189 = vmatprep.subr.bf16.mxu0 0
        %1190 = vmatpush1.bf16.msra.mxu0 0
        %1191 = vmatprep.subr.bf16.mxu0 0
        %1192 = vmatpush1.bf16.msra.mxu0 0
        %1193 = vmatprep.subr.bf16.mxu0 0
        %1194 = vmatpush1.bf16.msra.mxu0 0
        %1195 = vmatprep.subr.bf16.mxu0 0
        %1196 = vmatpush1.bf16.msra.mxu0 0
        %1197 = vmatprep.subr.bf16.mxu0 0
        %1198 = vmatpush1.bf16.msra.mxu0 0
        %1199 = vmatprep.subr.bf16.mxu0 0
        %1200 = vmatpush1.bf16.msra.mxu0 0
        %1201 = vmatprep.subr.bf16.mxu0 0
        %1202 = vmatpush1.bf16.msra.mxu0 0
        %1203 = vmatprep.subr.bf16.mxu0 0
        %1204 = vmatpush1.bf16.msra.mxu0 0
        %1205 = vmatprep.subr.bf16.mxu0 0
        %1206 = vmatpush1.bf16.msra.mxu0 0
        %1207 = vmatprep.mubr.bf16.mxu0 0
        %1208 = vmatmul.mubr.bf16.gmra.mrb[0].mxu0 %v1173
        %v1209 = vpop.f32.mrb[0].mxu0
        %v1210 = vadd.f32 %v1161, %v1209
        %v1211 = vpop.f32.mrb[0].mxu0
        %v1212 = vpop.f32.mrb[0].mxu0
        %v1213 = vpop.f32.mrb[0].mxu0
        %1214 = vdwg.mxu0
        %v1215 = vld [vmem:[%s757] sm:$0x1]
        %v1217 = vlaneseq
        %v1218 = vshrl.u32 %v1217, 7
        %v1219 = vsub.s32 0, %v1218
        %v1220 = vrot.slane %v1215, %v1219
        %v1222 = vadd.f32 %v1210, %v1220
        %v1223 = vadd.f32 %v1222, %v779
        %v1224 = vld [vmem:[%s626] sm:$0x1]
        %v1225 = vld [vmem:[%s634] sm:$0x1]
        %v1226 = vsel %vm782, %v1223, 0.0
        %1227 = vadd.xlane.f32.xlu0 %v1226
        %v1228 = vpop.xlane.xlu0 %1227
        %v1229 = vmul.f32 %v1228, %v786
        %v1230 = vsub.f32 %v1223, %v1229
        %v1231 = vmul.f32 %v1230, %v1230
        %v1232 = vsel %vm782, %v1231, 0.0
        %1233 = vadd.xlane.f32.xlu0 %v1232
        %v1234 = vpop.xlane.xlu0 %1233
        %v1235 = vmul.f32 %v1234, %v786
        %v1236 = vadd.f32 %v1235, 1e-05
        %v1237 = vrsqrt.pop %v1236
        %v1238 = vmul.f32 %v1230, %v1237
        %v1240 = vlaneseq
        %v1241 = vshrl.u32 %v1240, 7
        %v1242 = vsub.s32 0, %v1241
        %v1243 = vrot.slane %v1224, %v1242
        %v1245 = vmul.f32 %v1238, %v1243
        %v1247 = vlaneseq
        %v1248 = vshrl.u32 %v1247, 7
        %v1249 = vsub.s32 0, %v1248
        %v1250 = vrot.slane %v1225, %v1249
        %v1252 = vadd.f32 %v1245, %v1250
        %v1253 = vpack.c.bf16 %v1252, %v1252
        %v1254 = vld [vmem:[%s762] sm:$0xf]
        %v1255 = vld [vmem:[%s762 + $0x4] sm:$0xf]
        %v1256 = vld [vmem:[%s762 + $0x8] sm:$0xf]
        %v1257 = vld [vmem:[%s762 + $0xc] sm:$0xf]
        %v1258 = vld [vmem:[%s642] sm:$0x1]
        %v1260 = vlaneseq
        %v1261 = vshrl.u32 %v1260, 7
        %v1262 = vsub.s32 0, %v1261
        %v1263 = vrot.slane %v1258, %v1262
        %v1269 = vunpack.c.l.b16 %v1254
        %v1270 = vunpack.c.l.b16 %v1255
        %v1271 = vunpack.c.l.b16 %v1256
        %v1272 = vunpack.c.l.b16 %v1257
        %v1273 = vpack.c.b16 %v1270, %v1269
        %v1274 = vpack.c.b16 %v1272, %v1271
        %v1278 = vsel %vm782, %v1253, 0
        %1280 = vmatprep.subr.bf16.mxu0 0
        %1281 = vmatpush1.bf16.msra.mxu0 %v1273
        %1282 = vmatprep.subr.bf16.mxu0 0
        %1283 = vmatpush1.bf16.msra.mxu0 %v1274
        %1284 = vmatprep.subr.bf16.mxu0 0
        %1285 = vmatpush1.bf16.msra.mxu0 0
        %1286 = vmatprep.subr.bf16.mxu0 0
        %1287 = vmatpush1.bf16.msra.mxu0 0
        %1288 = vmatprep.subr.bf16.mxu0 0
        %1289 = vmatpush1.bf16.msra.mxu0 0
        %1290 = vmatprep.subr.bf16.mxu0 0
        %1291 = vmatpush1.bf16.msra.mxu0 0
        %1292 = vmatprep.subr.bf16.mxu0 0
        %1293 = vmatpush1.bf16.msra.mxu0 0
        %1294 = vmatprep.subr.bf16.mxu0 0
        %1295 = vmatpush1.bf16.msra.mxu0 0
        %1296 = vmatprep.subr.bf16.mxu0 0
        %1297 = vmatpush1.bf16.msra.mxu0 0
        %1298 = vmatprep.subr.bf16.mxu0 0
        %1299 = vmatpush1.bf16.msra.mxu0 0
        %1300 = vmatprep.subr.bf16.mxu0 0
        %1301 = vmatpush1.bf16.msra.mxu0 0
        %1302 = vmatprep.subr.bf16.mxu0 0
        %1303 = vmatpush1.bf16.msra.mxu0 0
        %1304 = vmatprep.subr.bf16.mxu0 0
        %1305 = vmatpush1.bf16.msra.mxu0 0
        %1306 = vmatprep.subr.bf16.mxu0 0
        %1307 = vmatpush1.bf16.msra.mxu0 0
        %1308 = vmatprep.subr.bf16.mxu0 0
        %1309 = vmatpush1.bf16.msra.mxu0 0
        %1310 = vmatprep.subr.bf16.mxu0 0
        %1311 = vmatpush1.bf16.msra.mxu0 0
        %1312 = vmatprep.mubr.bf16.mxu0 0
        %1313 = vmatmul.mubr.bf16.gmra.mrb[0].mxu0 %v1278
        %v1314 = vpop.f32.mrb[0].mxu0
        %v1315 = vadd.f32 %v1263, %v1314
        %v1316 = vpop.f32.mrb[0].mxu0
        %v1317 = vpop.f32.mrb[0].mxu0
        %v1318 = vpop.f32.mrb[0].mxu0
        %1319 = vdwg.mxu0
        %v1320 = vmul.f32 %v1315, 0.5
        %v1321 = vmul.f32 %v1315, 0.044715
        %v1322 = vmul.f32 %v1321, %v1315
        %v1323 = vmul.f32 %v1322, %v1315
        %v1324 = vadd.f32 %v1315, %v1323
        %v1325 = vmul.f32 %v1324, 0.7978846
        %v1326 = vtanh.pop %v1325
        %v1327 = vadd.f32 %v1326, 1.0
        %v1328 = vmul.f32 %v1320, %v1327
        %v1329 = vpack.c.bf16 %v1328, %v1328
        %v1330 = vld [vmem:[%s767] sm:$0xf]
        %v1331 = vld [vmem:[%s767 + $0x4] sm:$0xf]
        %v1332 = vld [vmem:[%s767 + $0x8] sm:$0xf]
        %v1333 = vld [vmem:[%s767 + $0xc] sm:$0xf]
        %v1334 = vld [vmem:[%s767 + $0x10] sm:$0xf]
        %v1335 = vld [vmem:[%s767 + $0x14] sm:$0xf]
        %v1336 = vld [vmem:[%s767 + $0x18] sm:$0xf]
        %v1337 = vld [vmem:[%s767 + $0x1c] sm:$0xf]
        %v1338 = vld [vmem:[%s770] sm:$0x1]
        %v1340 = vlaneseq
        %v1341 = vshrl.u32 %v1340, 7
        %v1342 = vsub.s32 0, %v1341
        %v1343 = vrot.slane %v1338, %v1342
        %v1353 = vunpack.c.l.b16 %v1330
        %v1354 = vunpack.c.l.b16 %v1331
        %v1355 = vunpack.c.l.b16 %v1332
        %v1356 = vunpack.c.l.b16 %v1333
        %v1357 = vunpack.c.l.b16 %v1334
        %v1358 = vunpack.c.l.b16 %v1335
        %v1359 = vunpack.c.l.b16 %v1336
        %v1360 = vunpack.c.l.b16 %v1337
        %v1361 = vpack.c.b16 %v1354, %v1353
        %v1362 = vpack.c.b16 %v1356, %v1355
        %v1363 = vpack.c.b16 %v1358, %v1357
        %v1364 = vpack.c.b16 %v1360, %v1359
        %vm1369 = vcmask 523264
        %v1371 = vsel %vm1369, %v1329, 0
        %1373 = vmatprep.subr.bf16.mxu0 0
        %1374 = vmatpush1.bf16.msra.mxu0 %v1361
        %1375 = vmatprep.subr.bf16.mxu0 0
        %1376 = vmatpush1.bf16.msra.mxu0 %v1362
        %1377 = vmatprep.subr.bf16.mxu0 0
        %1378 = vmatpush1.bf16.msra.mxu0 %v1363
        %1379 = vmatprep.subr.bf16.mxu0 0
        %1380 = vmatpush1.bf16.msra.mxu0 %v1364
        %1381 = vmatprep.subr.bf16.mxu0 0
        %1382 = vmatpush1.bf16.msra.mxu0 0
        %1383 = vmatprep.subr.bf16.mxu0 0
        %1384 = vmatpush1.bf16.msra.mxu0 0
        %1385 = vmatprep.subr.bf16.mxu0 0
        %1386 = vmatpush1.bf16.msra.mxu0 0
        %1387 = vmatprep.subr.bf16.mxu0 0
        %1388 = vmatpush1.bf16.msra.mxu0 0
        %1389 = vmatprep.subr.bf16.mxu0 0
        %1390 = vmatpush1.bf16.msra.mxu0 0
        %1391 = vmatprep.subr.bf16.mxu0 0
        %1392 = vmatpush1.bf16.msra.mxu0 0
        %1393 = vmatprep.subr.bf16.mxu0 0
        %1394 = vmatpush1.bf16.msra.mxu0 0
        %1395 = vmatprep.subr.bf16.mxu0 0
        %1396 = vmatpush1.bf16.msra.mxu0 0
        %1397 = vmatprep.subr.bf16.mxu0 0
        %1398 = vmatpush1.bf16.msra.mxu0 0
        %1399 = vmatprep.subr.bf16.mxu0 0
        %1400 = vmatpush1.bf16.msra.mxu0 0
        %1401 = vmatprep.subr.bf16.mxu0 0
        %1402 = vmatpush1.bf16.msra.mxu0 0
        %1403 = vmatprep.subr.bf16.mxu0 0
        %1404 = vmatpush1.bf16.msra.mxu0 0
        %1405 = vmatprep.mubr.bf16.mxu0 0
        %1406 = vmatmul.mubr.bf16.gmra.mrb[0].mxu0 %v1371
        %v1407 = vpop.f32.mrb[0].mxu0
        %v1408 = vadd.f32 %v1343, %v1407
        %v1409 = vpop.f32.mrb[0].mxu0
        %v1410 = vpop.f32.mrb[0].mxu0
        %v1411 = vpop.f32.mrb[0].mxu0
        %1412 = vdwg.mxu0
        %v1413 = vadd.f32 %v1408, %v1223
        %p1414 = scmp.lt.s32.totalorder %s43, 1
        // Predicated region
        $region101: #{tpu_custom_call.1} parent=79 // pred_check
          %p1415 = pneg %p1414
        $region102: #{tpu_custom_call.1} parent=79 // pred_check_branch
          %1417 = sbr.rel (%p1415) target = $region104
        $region103: #{tpu_custom_call.1} parent=79 // pred_region
          %1418 = vst.msk [vmem:[%s735] sm:$0xff] %vm782, %v1413
        $region104: #{tpu_custom_call.1} parent=79 // pred_fallthru
          _
        %p1419 = scmp.eq.s32.totalorder %s43, 1
        // Predicated region
        $region105: #{tpu_custom_call.1} parent=79 // pred_check
          %p1420 = pneg %p1419
        $region106: #{tpu_custom_call.1} parent=79 // pred_check_branch
          %1422 = sbr.rel (%p1420) target = $region108
        $region107: #{tpu_custom_call.1} parent=79 // pred_region
          %v1423 = vld [vmem:[%s13] sm:$0x1]
          %v1424 = vld [vmem:[%s14] sm:$0x1]
          %v1425 = vsel %vm782, %v1413, 0.0
          %1426 = vadd.xlane.f32.xlu0 %v1425
          %v1427 = vpop.xlane.xlu0 %1426
          %v1428 = vmul.f32 %v1427, %v786
          %v1429 = vsub.f32 %v1413, %v1428
          %v1430 = vmul.f32 %v1429, %v1429
          %v1431 = vsel %vm782, %v1430, 0.0
          %1432 = vadd.xlane.f32.xlu0 %v1431
          %v1433 = vpop.xlane.xlu0 %1432
          %v1434 = vmul.f32 %v1433, %v786
          %v1435 = vadd.f32 %v1434, 1e-05
          %v1436 = vrsqrt.pop %v1435
          %v1437 = vmul.f32 %v1429, %v1436
          %v1439 = vlaneseq
          %v1440 = vshrl.u32 %v1439, 7
          %v1441 = vsub.s32 0, %v1440
          %v1442 = vrot.slane %v1423, %v1441
          %v1444 = vmul.f32 %v1437, %v1442
          %v1446 = vlaneseq
          %v1447 = vshrl.u32 %v1446, 7
          %v1448 = vsub.s32 0, %v1447
          %v1449 = vrot.slane %v1424, %v1448
          %v1451 = vadd.f32 %v1444, %v1449
          %1452 = vst.msk [vmem:[%s735] sm:$0xff] %vm782, %v1451
        $region108: #{tpu_custom_call.1} parent=79 // pred_fallthru
          _
        %s1453 = sand.u32 %s438, 1
        %s1454 = scalar_lea.sflag [#allocation4], %s1453
        %s1455 = sand.u32 %s438, 1
        %s1456 = smul.addr %s1455, 8
        %s1457 = scalar_lea.vmem [#allocation10], %s1456
        // Predicated region
        $region109: #{tpu_custom_call.1} parent=79 // pred_check
          %p1458 = pneg %p448
        $region110: #{tpu_custom_call.1} parent=79 // pred_check_branch
          %1460 = sbr.rel (%p1458) target = $region112
        $region111: #{tpu_custom_call.1} parent=79 // pred_region
          %s1462 = ssub.s32 128, 128
          %1463 = vsyncadd %s1454, %s1462
          %s1464 = smul.addr %s42, 128
          %s1465 = scalar_lea.hbm %s15, %s1464
          %s1467 = sshll.u32 %s1457, 4
          %s1468 = int_to_ptr.vmem [resolvable:$true] %s1467
          %1470 = dma.vmem_to_hbm [thread:$0]  %s1468, 128, %s1465, %s1454
        $region112: #{tpu_custom_call.1} parent=79 // pred_fallthru
          _
      $region80: #{tpu_custom_call.1} parent=5 // pred_fallthru
        _
      %p1471 = scmp.le.s32.totalorder 2, %s33
      // Predicated region
      $region113: #{tpu_custom_call.1} parent=5 // pred_check
        %p1472 = pneg %p1471
      $region114: #{tpu_custom_call.1} parent=5 // pred_check_branch
        %1474 = sbr.rel (%p1472) target = $region116
      $region115: #{tpu_custom_call.1} parent=5 // pred_region
        %s1475 = ssub.s32 %s33, 2
        // Predicated region
        $region117: #{tpu_custom_call.1} parent=115 // pred_check
          %p1476 = pneg %p454
        $region118: #{tpu_custom_call.1} parent=115 // pred_check_branch
          %1478 = sbr.rel (%p1476) target = $region120
        $region119: #{tpu_custom_call.1} parent=115 // pred_region
          %s1479 = sand.u32 %s439, 1
          %s1480 = scalar_lea.sflag [#allocation4], %s1479
          %s1481 = sand.u32 %s439, 1
          %s1482 = smul.addr %s1481, 8
          %s1483 = scalar_lea.vmem [#allocation10], %s1482
          %1484 = dma.done %s1480, 128
        $region120: #{tpu_custom_call.1} parent=115 // pred_fallthru
          _
      $region116: #{tpu_custom_call.1} parent=5 // pred_fallthru
        _
    $region6: #{tpu_custom_call.1} parent=1 // loop_footer
      %s37 = sadd.s32 1, %s33
    $region7: #{tpu_custom_call.1} parent=1 // loop_footer_branch
      %32 = sbr.rel target = $region3
    $region8: #{tpu_custom_call.1} parent=1 // loop_exit
      _
    %1485 = vsyncpa [#allocation3], 1
    %s1486 = scalar_lea.sflag [#allocation3], 1
    %1487 = vsyncpa %s1486, 1
    %1488 = vsyncpa [#allocation6], 1
    %s1489 = scalar_lea.sflag [#allocation6], 1
    %1490 = vsyncpa %s1489, 1
    %1491 = vsyncpa [#allocation9], 1
    %s1492 = scalar_lea.sflag [#allocation9], 1
    %1493 = vsyncpa %s1492, 1
    %1494 = vsyncpa [#allocation4], 1
    %s1495 = scalar_lea.sflag [#allocation4], 1
    %1496 = vsyncpa %s1495, 1

</llo_original>
